<compile_context>
chip_gen: v7x
topology: tpu7x:2x2x1
jax: 0.10.0
libtpu: 0.0.40
codegen_flags: <defaults>
</compile_context>

<pallas_src>
import jax
import jax.numpy as jnp
import numpy as np
from jax import lax
from jax.experimental import pallas as pl
from jax.experimental.pallas import tpu as pltpu

EPS = 1e-3  # BatchNorm2d eps used by DownsamplerBlock


def _divisors(n):
    return [d for d in range(1, n + 1) if n % d == 0]


def downsampler_block(x_nchw, m_nchw, params,
                      act_dtype=jnp.float32, out_dtype=jnp.float32):
    """x_nchw: [N, Cin, H, W], m_nchw: [N, 1, H, W]
       -> (out [N, Cout, H/2, W/2], m [N, 1, H/2, W/2])."""
    N, Cin, H, W = x_nchw.shape
    assert H % 2 == 0 and W % 2 == 0, "DownsamplerBlock expects even H, W"
    Ho, Wo = H // 2, W // 2
    P = Ho * Wo
    conv_w = params["conv_w"]                       # torch OIHW: [C1, Cin, 3, 3]
    C1 = conv_w.shape[0]
    assert C1 >= 1, "noutput must be > ninput"
    Cout = C1 + Cin

    x = x_nchw.astype(jnp.float32)
    m = m_nchw.astype(jnp.float32)

    # ---- fold BatchNorm (+ SAConv bias) into weights / per-channel affine
    gamma = params["bn_gamma"].astype(jnp.float32)
    beta = params["bn_beta"].astype(jnp.float32)
    mean = params["bn_mean"].astype(jnp.float32)
    var = params["bn_var"].astype(jnp.float32)
    scale = gamma * lax.rsqrt(var + EPS)                                   # [Cout]
    scale_c, scale_p = scale[:C1], scale[C1:]
    # w_fold[t] = conv_w[:, :, ki, kj] * scale_c   with tap index t = ki*3 + kj
    w_fold = (jnp.transpose(conv_w.astype(jnp.float32), (2, 3, 0, 1))
              .reshape(9, C1, Cin) * scale_c[None, :, None]).astype(act_dtype)
    b_fold = ((params["conv_b"].astype(jnp.float32) - mean[:C1]) * scale_c
              + beta[:C1]).reshape(C1, 1)                                  # [C1, 1]
    shift_pool = (beta[C1:] - mean[C1:] * scale_p).reshape(Cin, 1)         # [Cin, 1]
    scale_pool = scale_p.reshape(Cin, 1)                                   # [Cin, 1]

    # ---- stride-2 parity decomposition (the ONLY full-size glue: exactly 1x x+m)
    def parity_planes(a):                      # [N, C, H, W] -> 4 x [N, C, Ho*Wo]
        C = a.shape[1]
        return (a[:, :, 0::2, 0::2].reshape(N, C, P),
                a[:, :, 0::2, 1::2].reshape(N, C, P),
                a[:, :, 1::2, 0::2].reshape(N, C, P),
                a[:, :, 1::2, 1::2].reshape(N, C, P))

    xee, xeo, xoe, xoo = [p.astype(act_dtype) for p in parity_planes(x)]
    mee, meo, moe, moo = parity_planes(m)      # kept f32: exact mask max-pool

    # ---- VMEM-budget-driven tile: k whole output rows per grid step, k | Ho
    act_bytes = jnp.dtype(act_dtype).itemsize
    out_bytes = jnp.dtype(out_dtype).itemsize
    per_lane = (2 * (4 * Cin * act_bytes + 4 * 4 + Cout * out_bytes + 4)   # dbl-buffered blocks
                + 9 * Cin * act_bytes + 4 * (C1 + Cin) + 16)               # live temps (rough)
    budget = 24 << 20                          # leaves headroom on v7x (64 MiB VMEM)
    lane_cap = max(Wo, min(8192, budget // per_lane))
    best_any, best_aligned = 1, None
    for cand in _divisors(Ho):
        tp = cand * Wo
        if tp <= lane_cap:
            best_any = max(best_any, cand)
            if cand == Ho or tp % 128 == 0:    # prefer lane-aligned / full-dim tiles
                best_aligned = cand
    k = best_aligned if best_aligned is not None else best_any
    tile_p = k * Wo                            # k | Ho  =>  P_pad == P, no output copy
    T = Ho // k

    # ---- per-tile row-halo tensors (row k*t - 1 of each row-shifted plane; zeros at t=0)
    def row_halo(plane_flat, dtype):           # [N, C, P] -> [N, T, C, Wo]
        C = plane_flat.shape[1]
        z = jnp.zeros((N, 1, C, Wo), dtype)
        if T == 1:
            return z
        p4 = plane_flat.reshape(N, C, Ho, Wo)
        h = jnp.moveaxis(p4[:, :, k - 1:Ho - 1:k, :], 2, 1).astype(dtype)  # [N, T-1, C, Wo]
        return jnp.concatenate([z, h], axis=1)

    xoe_h = row_halo(xoe, act_dtype)
    xoo_h = row_halo(xoo, act_dtype)
    moe_h = row_halo(moe, jnp.float32)
    moo_h = row_halo(moo, jnp.float32)

    # column-0 mask (1.0 where ow != 0): zero-fills column-shifted taps at the left edge
    cmask = ((jnp.arange(tile_p, dtype=jnp.int32) % Wo) != 0).astype(act_dtype)
    cmask = cmask.reshape(1, tile_p)

    vmem_limit = int(min(48 << 20, max(16 << 20, 2 * per_lane * tile_p)))

    def kernel(cmask_ref, xee_ref, xeo_ref, xoe_ref, xoo_ref,
               mee_ref, meo_ref, moe_ref, moo_ref,
               xoeh_ref, xooh_ref, moeh_ref, mooh_ref,
               w_ref, b_ref, sp_ref, bp_ref, y_ref, mout_ref):
        f32 = jnp.float32
        cm = cmask_ref[...]                                   # [1, tile_p]

        def col_shift(v):          # v[:, p] <- v[:, p-1], zero where ow == 0
            if tile_p == 1:
                return v * cm
            rolled = jnp.concatenate([v[:, tile_p - 1:], v[:, :tile_p - 1]], axis=1)
            return rolled * cm

        def row_shift(v, halo):    # v[:, p] <- v[:, p-Wo], halo fills the first row
            if tile_p == Wo:
                return halo
            return jnp.concatenate([halo, v[:, :tile_p - Wo]], axis=1)

        # unmasked parity planes of this tile
        pee = xee_ref[0]; peo = xeo_ref[0]; poe = xoe_ref[0]; poo = xoo_ref[0]  # [Cin, tp]
        qee = mee_ref[0]; qeo = meo_ref[0]; qoe = moe_ref[0]; qoo = moo_ref[0]  # [1, tp] f32

        # ---- SAConv hot path: mask in-kernel, 3x3 stride-2 conv as 9 accumulated dots
        a_ee = pee * qee.astype(act_dtype)
        a_eo = peo * qeo.astype(act_dtype)
        a_oe = poe * qoe.astype(act_dtype)
        a_oo = poo * qoo.astype(act_dtype)
        h_oe = xoeh_ref[0, 0] * moeh_ref[0, 0].astype(act_dtype)    # [Cin, Wo]
        h_oo = xooh_ref[0, 0] * mooh_ref[0, 0].astype(act_dtype)
        r_oe = row_shift(a_oe, h_oe)
        r_oo = row_shift(a_oo, h_oo)

        def dot_t(t, tap):
            return jnp.dot(w_ref[t], tap, preferred_element_type=f32)

        acc = dot_t(4, a_ee)                       # tap (1,1)
        acc += dot_t(5, a_eo)                      # tap (1,2)
        acc += dot_t(3, col_shift(a_eo))           # tap (1,0)
        acc += dot_t(7, a_oe)                      # tap (2,1)
        acc += dot_t(8, a_oo)                      # tap (2,2)
        acc += dot_t(6, col_shift(a_oo))           # tap (2,0)
        acc += dot_t(1, r_oe)                      # tap (0,1)
        acc += dot_t(2, r_oo)                      # tap (0,2)
        acc += dot_t(0, col_shift(r_oo))           # tap (0,0)
        conv = acc + b_ref[...]                    # BN + SAConv bias folded
        y_ref[0, :C1, :] = jnp.maximum(conv, 0.0).astype(y_ref.dtype)

        # ---- MaxPool2d(2,2) half: the parity planes ARE the 4 candidates
        pooled = jnp.maximum(jnp.maximum(pee, peo), jnp.maximum(poe, poo))
        pooled = pooled.astype(f32) * sp_ref[...] + bp_ref[...]
        y_ref[0, C1:, :] = jnp.maximum(pooled, 0.0).astype(y_ref.dtype)

        # ---- MaxPool2d(3, stride=2, pad=1) on the mask (m >= 0 => zero fill == -inf pad)
        qoe_r = row_shift(qoe, moeh_ref[0, 0])
        qoo_r = row_shift(qoo, mooh_ref[0, 0])
        mp = jnp.maximum(jnp.maximum(qee, qeo), jnp.maximum(qoe, qoo))
        mp = jnp.maximum(mp, jnp.maximum(qoe_r, qoo_r))
        mp = jnp.maximum(mp, jnp.maximum(col_shift(qeo), col_shift(qoo)))
        mp = jnp.maximum(mp, col_shift(qoo_r))
        mout_ref[0] = mp

    x_spec = pl.BlockSpec((1, Cin, tile_p), lambda n, t: (n, 0, t))
    m_spec = pl.BlockSpec((1, 1, tile_p), lambda n, t: (n, 0, t))
    xh_spec = pl.BlockSpec((1, 1, Cin, Wo), lambda n, t: (n, t, 0, 0))
    mh_spec = pl.BlockSpec((1, 1, 1, Wo), lambda n, t: (n, t, 0, 0))

    y, m_out = pl.pallas_call(
        kernel,
        out_shape=(jax.ShapeDtypeStruct((N, Cout, P), out_dtype),
                   jax.ShapeDtypeStruct((N, 1, P), jnp.float32)),
        grid=(N, T),
        in_specs=[
            pl.BlockSpec((1, tile_p), lambda n, t: (0, 0)),          # ow==0 mask
            x_spec, x_spec, x_spec, x_spec,                          # x parity planes
            m_spec, m_spec, m_spec, m_spec,                          # m parity planes
            xh_spec, xh_spec,                                        # x row halos (oe, oo)
            mh_spec, mh_spec,                                        # m row halos (oe, oo)
            pl.BlockSpec((9, C1, Cin), lambda n, t: (0, 0, 0)),      # folded conv weights
            pl.BlockSpec((C1, 1), lambda n, t: (0, 0)),              # folded conv bias
            pl.BlockSpec((Cin, 1), lambda n, t: (0, 0)),             # pooled-half BN scale
            pl.BlockSpec((Cin, 1), lambda n, t: (0, 0)),             # pooled-half BN shift
        ],
        out_specs=(pl.BlockSpec((1, Cout, tile_p), lambda n, t: (n, 0, t)),
                   pl.BlockSpec((1, 1, tile_p), lambda n, t: (n, 0, t))),
        compiler_params=pltpu.CompilerParams(
            dimension_semantics=("parallel", "parallel"),
            vmem_limit_bytes=vmem_limit),
    )(cmask, xee, xeo, xoe, xoo, mee, meo, moe, moo,
      xoe_h, xoo_h, moe_h, moo_h, w_fold, b_fold, scale_pool, shift_pool)

    # lane-dense NCHW-flattened outputs, P_pad == P by construction -> reshape only
    y = y.reshape(N, Cout, Ho, Wo)
    m_out = m_out.reshape(N, 1, Ho, Wo)
    return y, m_out


def reference(x, m, params):
    """Pure-JAX reference (NCHW) for correctness checking."""
    conv = lax.conv_general_dilated(
        x * m, params["conv_w"], window_strides=(2, 2),
        padding=((1, 1), (1, 1)),
        dimension_numbers=("NCHW", "OIHW", "NCHW"),
        precision=lax.Precision.HIGHEST)
    conv = conv + params["conv_b"][None, :, None, None]
    xpool = lax.reduce_window(x, -jnp.inf, lax.max,
                              (1, 1, 2, 2), (1, 1, 2, 2), "VALID")
    out = jnp.concatenate([conv, xpool], axis=1)
    scale = params["bn_gamma"] / jnp.sqrt(params["bn_var"] + EPS)
    out = (out - params["bn_mean"][None, :, None, None]) * scale[None, :, None, None] \
          + params["bn_beta"][None, :, None, None]
    out = jnp.maximum(out, 0.0)
    mpool = lax.reduce_window(m, -jnp.inf, lax.max,
                              (1, 1, 3, 3), (1, 1, 2, 2),
                              ((0, 0), (0, 0), (1, 1), (1, 1)))
    return out, mpool


if __name__ == "__main__":
    key = jax.random.PRNGKey(0)
    N, Cin, H, W = 2, 4, 16, 16
    noutput = 8
    C1 = noutput - Cin

    ks = jax.random.split(key, 8)
    x = jax.random.normal(ks[0], (N, Cin, H, W), jnp.float32)
    m = (jax.random.uniform(ks[1], (N, 1, H, W)) > 0.4).astype(jnp.float32)

    fan_out = C1 * 9  # kaiming_normal_(mode='fan_out')
    params = {
        "conv_w": jax.random.normal(ks[2], (C1, Cin, 3, 3), jnp.float32)
                  * jnp.sqrt(2.0 / fan_out),
        "conv_b": 0.1 * jax.random.normal(ks[3], (C1,), jnp.float32),
        "bn_gamma": 1.0 + 0.1 * jax.random.normal(ks[4], (noutput,), jnp.float32),
        "bn_beta": 0.1 * jax.random.normal(ks[5], (noutput,), jnp.float32),
        "bn_mean": 0.1 * jax.random.normal(ks[6], (noutput,), jnp.float32),
        "bn_var": 1.0 + 0.1 * jax.random.uniform(ks[7], (noutput,), jnp.float32),
    }

    y_ref, m_ref = reference(x, m, params)

    # f32 path (default): tight check against HIGHEST-precision reference.
    y, m_out = downsampler_block(x, m, params)
    jax.block_until_ready((y, m_out))
    np.testing.assert_allclose(np.asarray(y), np.asarray(y_ref), rtol=1e-3, atol=1e-3)
    np.testing.assert_allclose(np.asarray(m_out), np.asarray(m_ref), rtol=1e-6, atol=1e-6)

    # bf16 path (recommended on v6e/v7x): bf16 planes + bf16 weights -> native MXU,
    # bf16 outputs halve the output write. Looser tolerance.
    y16, m16 = downsampler_block(x, m, params,
                                 act_dtype=jnp.bfloat16, out_dtype=jnp.bfloat16)
    jax.block_until_ready((y16, m16))
    np.testing.assert_allclose(np.asarray(y16.astype(jnp.float32)), np.asarray(y_ref),
                               rtol=5e-2, atol=1e-1)
    np.testing.assert_allclose(np.asarray(m16), np.asarray(m_ref), rtol=1e-6, atol=1e-6)

    print("KERNEL_OK")
</pallas_src>

<mosaic_0001>
module attributes {stable_mosaic.version = 11 : i64} {
  func.func @kernel(%arg0: i32, %arg1: i32, %arg2: memref<1x64xf32, #tpu.memory_space<vmem>>, %arg3: memref<1x4x64xf32, #tpu.memory_space<vmem>>, %arg4: memref<1x4x64xf32, #tpu.memory_space<vmem>>, %arg5: memref<1x4x64xf32, #tpu.memory_space<vmem>>, %arg6: memref<1x4x64xf32, #tpu.memory_space<vmem>>, %arg7: memref<1x1x64xf32, #tpu.memory_space<vmem>>, %arg8: memref<1x1x64xf32, #tpu.memory_space<vmem>>, %arg9: memref<1x1x64xf32, #tpu.memory_space<vmem>>, %arg10: memref<1x1x64xf32, #tpu.memory_space<vmem>>, %arg11: memref<1x1x4x8xf32, #tpu.memory_space<vmem>>, %arg12: memref<1x1x4x8xf32, #tpu.memory_space<vmem>>, %arg13: memref<1x1x1x8xf32, #tpu.memory_space<vmem>>, %arg14: memref<1x1x1x8xf32, #tpu.memory_space<vmem>>, %arg15: memref<9x4x4xf32, #tpu.memory_space<vmem>>, %arg16: memref<4x1xf32, #tpu.memory_space<vmem>>, %arg17: memref<4x1xf32, #tpu.memory_space<vmem>>, %arg18: memref<4x1xf32, #tpu.memory_space<vmem>>, %arg19: memref<1x8x64xf32, #tpu.memory_space<vmem>>, %arg20: memref<1x1x64xf32, #tpu.memory_space<vmem>>) attributes {dimension_semantics = [#tpu.dimension_semantics<parallel>, #tpu.dimension_semantics<parallel>], iteration_bounds = array<i64: 2, 1>, scalar_prefetch = 0 : i64, scratch_operands = 0 : i64, tpu.core_type = #tpu.core_type<tc>, window_params = [{pipeline_mode = #tpu.pipeline_mode<synchronous>, transform_indices = @transform_0, window_bounds = array<i64: 1, 64>}, {transform_indices = @transform_1, window_bounds = array<i64: 1, 4, 64>}, {transform_indices = @transform_2, window_bounds = array<i64: 1, 4, 64>}, {transform_indices = @transform_3, window_bounds = array<i64: 1, 4, 64>}, {transform_indices = @transform_4, window_bounds = array<i64: 1, 4, 64>}, {transform_indices = @transform_5, window_bounds = array<i64: 1, 1, 64>}, {transform_indices = @transform_6, window_bounds = array<i64: 1, 1, 64>}, {transform_indices = @transform_7, window_bounds = array<i64: 1, 1, 64>}, {transform_indices = @transform_8, window_bounds = array<i64: 1, 1, 64>}, {transform_indices = @transform_9, window_bounds = array<i64: 1, 1, 4, 8>}, {transform_indices = @transform_10, window_bounds = array<i64: 1, 1, 4, 8>}, {transform_indices = @transform_11, window_bounds = array<i64: 1, 1, 1, 8>}, {transform_indices = @transform_12, window_bounds = array<i64: 1, 1, 1, 8>}, {pipeline_mode = #tpu.pipeline_mode<synchronous>, transform_indices = @transform_13, window_bounds = array<i64: 9, 4, 4>}, {pipeline_mode = #tpu.pipeline_mode<synchronous>, transform_indices = @transform_14, window_bounds = array<i64: 4, 1>}, {pipeline_mode = #tpu.pipeline_mode<synchronous>, transform_indices = @transform_15, window_bounds = array<i64: 4, 1>}, {pipeline_mode = #tpu.pipeline_mode<synchronous>, transform_indices = @transform_16, window_bounds = array<i64: 4, 1>}, {transform_indices = @transform_17, window_bounds = array<i64: 1, 8, 64>}, {transform_indices = @transform_18, window_bounds = array<i64: 1, 1, 64>}]} {
    %c0 = arith.constant 0 : index
    %c0_0 = arith.constant 0 : index
    %0 = vector.load %arg2[%c0, %c0_0] : memref<1x64xf32, #tpu.memory_space<vmem>>, vector<1x64xf32>
    %c0_1 = arith.constant 0 : index
    %c0_2 = arith.constant 0 : index
    %c0_3 = arith.constant 0 : index
    %1 = vector.load %arg3[%c0_1, %c0_2, %c0_3] : memref<1x4x64xf32, #tpu.memory_space<vmem>>, vector<1x4x64xf32>
    %2 = vector.shape_cast %1 : vector<1x4x64xf32> to vector<4x64xf32>
    %c0_4 = arith.constant 0 : index
    %c0_5 = arith.constant 0 : index
    %c0_6 = arith.constant 0 : index
    %3 = vector.load %arg4[%c0_4, %c0_5, %c0_6] : memref<1x4x64xf32, #tpu.memory_space<vmem>>, vector<1x4x64xf32>
    %4 = vector.shape_cast %3 : vector<1x4x64xf32> to vector<4x64xf32>
    %c0_7 = arith.constant 0 : index
    %c0_8 = arith.constant 0 : index
    %c0_9 = arith.constant 0 : index
    %5 = vector.load %arg5[%c0_7, %c0_8, %c0_9] : memref<1x4x64xf32, #tpu.memory_space<vmem>>, vector<1x4x64xf32>
    %6 = vector.shape_cast %5 : vector<1x4x64xf32> to vector<4x64xf32>
    %c0_10 = arith.constant 0 : index
    %c0_11 = arith.constant 0 : index
    %c0_12 = arith.constant 0 : index
    %7 = vector.load %arg6[%c0_10, %c0_11, %c0_12] : memref<1x4x64xf32, #tpu.memory_space<vmem>>, vector<1x4x64xf32>
    %8 = vector.shape_cast %7 : vector<1x4x64xf32> to vector<4x64xf32>
    %c0_13 = arith.constant 0 : index
    %c0_14 = arith.constant 0 : index
    %c0_15 = arith.constant 0 : index
    %9 = vector.load %arg7[%c0_13, %c0_14, %c0_15] : memref<1x1x64xf32, #tpu.memory_space<vmem>>, vector<1x1x64xf32>
    %10 = vector.shape_cast %9 : vector<1x1x64xf32> to vector<1x64xf32>
    %c0_16 = arith.constant 0 : index
    %c0_17 = arith.constant 0 : index
    %c0_18 = arith.constant 0 : index
    %11 = vector.load %arg8[%c0_16, %c0_17, %c0_18] : memref<1x1x64xf32, #tpu.memory_space<vmem>>, vector<1x1x64xf32>
    %12 = vector.shape_cast %11 : vector<1x1x64xf32> to vector<1x64xf32>
    %c0_19 = arith.constant 0 : index
    %c0_20 = arith.constant 0 : index
    %c0_21 = arith.constant 0 : index
    %13 = vector.load %arg9[%c0_19, %c0_20, %c0_21] : memref<1x1x64xf32, #tpu.memory_space<vmem>>, vector<1x1x64xf32>
    %14 = vector.shape_cast %13 : vector<1x1x64xf32> to vector<1x64xf32>
    %c0_22 = arith.constant 0 : index
    %c0_23 = arith.constant 0 : index
    %c0_24 = arith.constant 0 : index
    %15 = vector.load %arg10[%c0_22, %c0_23, %c0_24] : memref<1x1x64xf32, #tpu.memory_space<vmem>>, vector<1x1x64xf32>
    %16 = vector.shape_cast %15 : vector<1x1x64xf32> to vector<1x64xf32>
    %17 = vector.broadcast %10 : vector<1x64xf32> to vector<4x64xf32>
    %18 = arith.mulf %2, %17 : vector<4x64xf32>
    %19 = vector.broadcast %12 : vector<1x64xf32> to vector<4x64xf32>
    %20 = arith.mulf %4, %19 : vector<4x64xf32>
    %21 = vector.broadcast %14 : vector<1x64xf32> to vector<4x64xf32>
    %22 = arith.mulf %6, %21 : vector<4x64xf32>
    %23 = vector.broadcast %16 : vector<1x64xf32> to vector<4x64xf32>
    %24 = arith.mulf %8, %23 : vector<4x64xf32>
    %c0_25 = arith.constant 0 : index
    %c0_26 = arith.constant 0 : index
    %c0_27 = arith.constant 0 : index
    %c0_28 = arith.constant 0 : index
    %25 = vector.load %arg11[%c0_25, %c0_26, %c0_27, %c0_28] : memref<1x1x4x8xf32, #tpu.memory_space<vmem>>, vector<1x1x4x8xf32>
    %26 = vector.shape_cast %25 : vector<1x1x4x8xf32> to vector<4x8xf32>
    %c0_29 = arith.constant 0 : index
    %c0_30 = arith.constant 0 : index
    %c0_31 = arith.constant 0 : index
    %c0_32 = arith.constant 0 : index
    %27 = vector.load %arg13[%c0_29, %c0_30, %c0_31, %c0_32] : memref<1x1x1x8xf32, #tpu.memory_space<vmem>>, vector<1x1x1x8xf32>
    %28 = vector.shape_cast %27 : vector<1x1x1x8xf32> to vector<1x8xf32>
    %29 = vector.broadcast %28 : vector<1x8xf32> to vector<4x8xf32>
    %30 = arith.mulf %26, %29 : vector<4x8xf32>
    %c0_33 = arith.constant 0 : index
    %c0_34 = arith.constant 0 : index
    %c0_35 = arith.constant 0 : index
    %c0_36 = arith.constant 0 : index
    %31 = vector.load %arg12[%c0_33, %c0_34, %c0_35, %c0_36] : memref<1x1x4x8xf32, #tpu.memory_space<vmem>>, vector<1x1x4x8xf32>
    %32 = vector.shape_cast %31 : vector<1x1x4x8xf32> to vector<4x8xf32>
    %c0_37 = arith.constant 0 : index
    %c0_38 = arith.constant 0 : index
    %c0_39 = arith.constant 0 : index
    %c0_40 = arith.constant 0 : index
    %33 = vector.load %arg14[%c0_37, %c0_38, %c0_39, %c0_40] : memref<1x1x1x8xf32, #tpu.memory_space<vmem>>, vector<1x1x1x8xf32>
    %34 = vector.shape_cast %33 : vector<1x1x1x8xf32> to vector<1x8xf32>
    %35 = vector.broadcast %34 : vector<1x8xf32> to vector<4x8xf32>
    %36 = arith.mulf %32, %35 : vector<4x8xf32>
    %37 = vector.extract_strided_slice %22 {offsets = [0, 0], sizes = [4, 56], strides = [1, 1]} : vector<4x64xf32> to vector<4x56xf32>
    %38 = tpu.concatenate %30, %37 in 1 : vector<4x8xf32>, vector<4x56xf32> -> vector<4x64xf32>
    %39 = vector.extract_strided_slice %24 {offsets = [0, 0], sizes = [4, 56], strides = [1, 1]} : vector<4x64xf32> to vector<4x56xf32>
    %40 = tpu.concatenate %36, %39 in 1 : vector<4x8xf32>, vector<4x56xf32> -> vector<4x64xf32>
    %c4 = arith.constant 4 : index
    %c0_41 = arith.constant 0 : index
    %c0_42 = arith.constant 0 : index
    %41 = vector.load %arg15[%c4, %c0_41, %c0_42] : memref<9x4x4xf32, #tpu.memory_space<vmem>>, vector<1x4x4xf32>
    %42 = vector.shape_cast %41 : vector<1x4x4xf32> to vector<4x4xf32>
    %cst = arith.constant dense<0.000000e+00> : vector<4x64xf32>
    %43 = tpu.matmul %42, %18, %cst {dimension_numbers = #tpu.dot_dimension_numbers<[1], [0], [0], [1], [0, 0, 1, 1], [], []>} : vector<4x4xf32>, vector<4x64xf32>, vector<4x64xf32> -> vector<4x64xf32>
    %c5 = arith.constant 5 : index
    %c0_43 = arith.constant 0 : index
    %c0_44 = arith.constant 0 : index
    %44 = vector.load %arg15[%c5, %c0_43, %c0_44] : memref<9x4x4xf32, #tpu.memory_space<vmem>>, vector<1x4x4xf32>
    %45 = vector.shape_cast %44 : vector<1x4x4xf32> to vector<4x4xf32>
    %cst_45 = arith.constant dense<0.000000e+00> : vector<4x64xf32>
    %46 = tpu.matmul %45, %20, %cst_45 {dimension_numbers = #tpu.dot_dimension_numbers<[1], [0], [0], [1], [0, 0, 1, 1], [], []>} : vector<4x4xf32>, vector<4x64xf32>, vector<4x64xf32> -> vector<4x64xf32>
    %47 = arith.addf %43, %46 : vector<4x64xf32>
    %48 = vector.extract_strided_slice %20 {offsets = [0, 63], sizes = [4, 1], strides = [1, 1]} : vector<4x64xf32> to vector<4x1xf32>
    %49 = vector.extract_strided_slice %20 {offsets = [0, 0], sizes = [4, 63], strides = [1, 1]} : vector<4x64xf32> to vector<4x63xf32>
    %50 = tpu.concatenate %48, %49 in 1 : vector<4x1xf32>, vector<4x63xf32> -> vector<4x64xf32>
    %51 = vector.broadcast %0 : vector<1x64xf32> to vector<4x64xf32>
    %52 = arith.mulf %50, %51 : vector<4x64xf32>
    %c3 = arith.constant 3 : index
    %c0_46 = arith.constant 0 : index
    %c0_47 = arith.constant 0 : index
    %53 = vector.load %arg15[%c3, %c0_46, %c0_47] : memref<9x4x4xf32, #tpu.memory_space<vmem>>, vector<1x4x4xf32>
    %54 = vector.shape_cast %53 : vector<1x4x4xf32> to vector<4x4xf32>
    %cst_48 = arith.constant dense<0.000000e+00> : vector<4x64xf32>
    %55 = tpu.matmul %54, %52, %cst_48 {dimension_numbers = #tpu.dot_dimension_numbers<[1], [0], [0], [1], [0, 0, 1, 1], [], []>} : vector<4x4xf32>, vector<4x64xf32>, vector<4x64xf32> -> vector<4x64xf32>
    %56 = arith.addf %47, %55 : vector<4x64xf32>
    %c7 = arith.constant 7 : index
    %c0_49 = arith.constant 0 : index
    %c0_50 = arith.constant 0 : index
    %57 = vector.load %arg15[%c7, %c0_49, %c0_50] : memref<9x4x4xf32, #tpu.memory_space<vmem>>, vector<1x4x4xf32>
    %58 = vector.shape_cast %57 : vector<1x4x4xf32> to vector<4x4xf32>
    %cst_51 = arith.constant dense<0.000000e+00> : vector<4x64xf32>
    %59 = tpu.matmul %58, %22, %cst_51 {dimension_numbers = #tpu.dot_dimension_numbers<[1], [0], [0], [1], [0, 0, 1, 1], [], []>} : vector<4x4xf32>, vector<4x64xf32>, vector<4x64xf32> -> vector<4x64xf32>
    %60 = arith.addf %56, %59 : vector<4x64xf32>
    %c8 = arith.constant 8 : index
    %c0_52 = arith.constant 0 : index
    %c0_53 = arith.constant 0 : index
    %61 = vector.load %arg15[%c8, %c0_52, %c0_53] : memref<9x4x4xf32, #tpu.memory_space<vmem>>, vector<1x4x4xf32>
    %62 = vector.shape_cast %61 : vector<1x4x4xf32> to vector<4x4xf32>
    %cst_54 = arith.constant dense<0.000000e+00> : vector<4x64xf32>
    %63 = tpu.matmul %62, %24, %cst_54 {dimension_numbers = #tpu.dot_dimension_numbers<[1], [0], [0], [1], [0, 0, 1, 1], [], []>} : vector<4x4xf32>, vector<4x64xf32>, vector<4x64xf32> -> vector<4x64xf32>
    %64 = arith.addf %60, %63 : vector<4x64xf32>
    %65 = vector.extract_strided_slice %24 {offsets = [0, 63], sizes = [4, 1], strides = [1, 1]} : vector<4x64xf32> to vector<4x1xf32>
    %66 = vector.extract_strided_slice %24 {offsets = [0, 0], sizes = [4, 63], strides = [1, 1]} : vector<4x64xf32> to vector<4x63xf32>
    %67 = tpu.concatenate %65, %66 in 1 : vector<4x1xf32>, vector<4x63xf32> -> vector<4x64xf32>
    %68 = vector.broadcast %0 : vector<1x64xf32> to vector<4x64xf32>
    %69 = arith.mulf %67, %68 : vector<4x64xf32>
    %c6 = arith.constant 6 : index
    %c0_55 = arith.constant 0 : index
    %c0_56 = arith.constant 0 : index
    %70 = vector.load %arg15[%c6, %c0_55, %c0_56] : memref<9x4x4xf32, #tpu.memory_space<vmem>>, vector<1x4x4xf32>
    %71 = vector.shape_cast %70 : vector<1x4x4xf32> to vector<4x4xf32>
    %cst_57 = arith.constant dense<0.000000e+00> : vector<4x64xf32>
    %72 = tpu.matmul %71, %69, %cst_57 {dimension_numbers = #tpu.dot_dimension_numbers<[1], [0], [0], [1], [0, 0, 1, 1], [], []>} : vector<4x4xf32>, vector<4x64xf32>, vector<4x64xf32> -> vector<4x64xf32>
    %73 = arith.addf %64, %72 : vector<4x64xf32>
    %c1 = arith.constant 1 : index
    %c0_58 = arith.constant 0 : index
    %c0_59 = arith.constant 0 : index
    %74 = vector.load %arg15[%c1, %c0_58, %c0_59] : memref<9x4x4xf32, #tpu.memory_space<vmem>>, vector<1x4x4xf32>
    %75 = vector.shape_cast %74 : vector<1x4x4xf32> to vector<4x4xf32>
    %cst_60 = arith.constant dense<0.000000e+00> : vector<4x64xf32>
    %76 = tpu.matmul %75, %38, %cst_60 {dimension_numbers = #tpu.dot_dimension_numbers<[1], [0], [0], [1], [0, 0, 1, 1], [], []>} : vector<4x4xf32>, vector<4x64xf32>, vector<4x64xf32> -> vector<4x64xf32>
    %77 = arith.addf %73, %76 : vector<4x64xf32>
    %c2 = arith.constant 2 : index
    %c0_61 = arith.constant 0 : index
    %c0_62 = arith.constant 0 : index
    %78 = vector.load %arg15[%c2, %c0_61, %c0_62] : memref<9x4x4xf32, #tpu.memory_space<vmem>>, vector<1x4x4xf32>
    %79 = vector.shape_cast %78 : vector<1x4x4xf32> to vector<4x4xf32>
    %cst_63 = arith.constant dense<0.000000e+00> : vector<4x64xf32>
    %80 = tpu.matmul %79, %40, %cst_63 {dimension_numbers = #tpu.dot_dimension_numbers<[1], [0], [0], [1], [0, 0, 1, 1], [], []>} : vector<4x4xf32>, vector<4x64xf32>, vector<4x64xf32> -> vector<4x64xf32>
    %81 = arith.addf %77, %80 : vector<4x64xf32>
    %82 = vector.extract_strided_slice %40 {offsets = [0, 63], sizes = [4, 1], strides = [1, 1]} : vector<4x64xf32> to vector<4x1xf32>
    %83 = vector.extract_strided_slice %40 {offsets = [0, 0], sizes = [4, 63], strides = [1, 1]} : vector<4x64xf32> to vector<4x63xf32>
    %84 = tpu.concatenate %82, %83 in 1 : vector<4x1xf32>, vector<4x63xf32> -> vector<4x64xf32>
    %85 = vector.broadcast %0 : vector<1x64xf32> to vector<4x64xf32>
    %86 = arith.mulf %84, %85 : vector<4x64xf32>
    %c0_64 = arith.constant 0 : index
    %c0_65 = arith.constant 0 : index
    %c0_66 = arith.constant 0 : index
    %87 = vector.load %arg15[%c0_64, %c0_65, %c0_66] : memref<9x4x4xf32, #tpu.memory_space<vmem>>, vector<1x4x4xf32>
    %88 = vector.shape_cast %87 : vector<1x4x4xf32> to vector<4x4xf32>
    %cst_67 = arith.constant dense<0.000000e+00> : vector<4x64xf32>
    %89 = tpu.matmul %88, %86, %cst_67 {dimension_numbers = #tpu.dot_dimension_numbers<[1], [0], [0], [1], [0, 0, 1, 1], [], []>} : vector<4x4xf32>, vector<4x64xf32>, vector<4x64xf32> -> vector<4x64xf32>
    %90 = arith.addf %81, %89 : vector<4x64xf32>
    %c0_68 = arith.constant 0 : index
    %c0_69 = arith.constant 0 : index
    %91 = vector.load %arg16[%c0_68, %c0_69] : memref<4x1xf32, #tpu.memory_space<vmem>>, vector<4x1xf32>
    %92 = vector.broadcast %91 : vector<4x1xf32> to vector<4x64xf32>
    %93 = arith.addf %90, %92 : vector<4x64xf32>
    %cst_70 = arith.constant 0.000000e+00 : f32
    %94 = vector.broadcast %cst_70 : f32 to vector<4x64xf32>
    %95 = arith.maximumf %93, %94 : vector<4x64xf32>
    %c0_71 = arith.constant 0 : index
    %c0_72 = arith.constant 0 : index
    %c0_73 = arith.constant 0 : index
    %96 = vector.load %arg19[%c0_71, %c0_72, %c0_73] : memref<1x8x64xf32, #tpu.memory_space<vmem>>, vector<1x4x64xf32>
    %97 = vector.shape_cast %96 : vector<1x4x64xf32> to vector<4x64xf32>
    %98 = vector.shape_cast %95 : vector<4x64xf32> to vector<1x4x64xf32>
    tpu.vector_store %arg19[%c0_71, %c0_72, %c0_73], %98 {strides = array<i32>} : memref<1x8x64xf32, #tpu.memory_space<vmem>>, vector<1x4x64xf32>,
    %99 = arith.maximumf %2, %4 : vector<4x64xf32>
    %100 = arith.maximumf %6, %8 : vector<4x64xf32>
    %101 = arith.maximumf %99, %100 : vector<4x64xf32>
    %c0_74 = arith.constant 0 : index
    %c0_75 = arith.constant 0 : index
    %102 = vector.load %arg17[%c0_74, %c0_75] : memref<4x1xf32, #tpu.memory_space<vmem>>, vector<4x1xf32>
    %103 = vector.broadcast %102 : vector<4x1xf32> to vector<4x64xf32>
    %104 = arith.mulf %101, %103 : vector<4x64xf32>
    %c0_76 = arith.constant 0 : index
    %c0_77 = arith.constant 0 : index
    %105 = vector.load %arg18[%c0_76, %c0_77] : memref<4x1xf32, #tpu.memory_space<vmem>>, vector<4x1xf32>
    %106 = vector.broadcast %105 : vector<4x1xf32> to vector<4x64xf32>
    %107 = arith.addf %104, %106 : vector<4x64xf32>
    %cst_78 = arith.constant 0.000000e+00 : f32
    %108 = vector.broadcast %cst_78 : f32 to vector<4x64xf32>
    %109 = arith.maximumf %107, %108 : vector<4x64xf32>
    %c0_79 = arith.constant 0 : index
    %c4_80 = arith.constant 4 : index
    %c0_81 = arith.constant 0 : index
    %110 = vector.load %arg19[%c0_79, %c4_80, %c0_81] : memref<1x8x64xf32, #tpu.memory_space<vmem>>, vector<1x4x64xf32>
    %111 = vector.shape_cast %110 : vector<1x4x64xf32> to vector<4x64xf32>
    %112 = vector.shape_cast %109 : vector<4x64xf32> to vector<1x4x64xf32>
    tpu.vector_store %arg19[%c0_79, %c4_80, %c0_81], %112 {strides = array<i32>} : memref<1x8x64xf32, #tpu.memory_space<vmem>>, vector<1x4x64xf32>,
    %c0_82 = arith.constant 0 : index
    %c0_83 = arith.constant 0 : index
    %c0_84 = arith.constant 0 : index
    %c0_85 = arith.constant 0 : index
    %113 = vector.load %arg13[%c0_82, %c0_83, %c0_84, %c0_85] : memref<1x1x1x8xf32, #tpu.memory_space<vmem>>, vector<1x1x1x8xf32>
    %114 = vector.shape_cast %113 : vector<1x1x1x8xf32> to vector<1x8xf32>
    %115 = vector.extract_strided_slice %14 {offsets = [0, 0], sizes = [1, 56], strides = [1, 1]} : vector<1x64xf32> to vector<1x56xf32>
    %116 = tpu.concatenate %114, %115 in 1 : vector<1x8xf32>, vector<1x56xf32> -> vector<1x64xf32>
    %c0_86 = arith.constant 0 : index
    %c0_87 = arith.constant 0 : index
    %c0_88 = arith.constant 0 : index
    %c0_89 = arith.constant 0 : index
    %117 = vector.load %arg14[%c0_86, %c0_87, %c0_88, %c0_89] : memref<1x1x1x8xf32, #tpu.memory_space<vmem>>, vector<1x1x1x8xf32>
    %118 = vector.shape_cast %117 : vector<1x1x1x8xf32> to vector<1x8xf32>
    %119 = vector.extract_strided_slice %16 {offsets = [0, 0], sizes = [1, 56], strides = [1, 1]} : vector<1x64xf32> to vector<1x56xf32>
    %120 = tpu.concatenate %118, %119 in 1 : vector<1x8xf32>, vector<1x56xf32> -> vector<1x64xf32>
    %121 = arith.maximumf %10, %12 : vector<1x64xf32>
    %122 = arith.maximumf %14, %16 : vector<1x64xf32>
    %123 = arith.maximumf %121, %122 : vector<1x64xf32>
    %124 = arith.maximumf %116, %120 : vector<1x64xf32>
    %125 = arith.maximumf %123, %124 : vector<1x64xf32>
    %126 = vector.extract_strided_slice %12 {offsets = [0, 63], sizes = [1, 1], strides = [1, 1]} : vector<1x64xf32> to vector<1x1xf32>
    %127 = vector.extract_strided_slice %12 {offsets = [0, 0], sizes = [1, 63], strides = [1, 1]} : vector<1x64xf32> to vector<1x63xf32>
    %128 = tpu.concatenate %126, %127 in 1 : vector<1x1xf32>, vector<1x63xf32> -> vector<1x64xf32>
    %129 = arith.mulf %128, %0 : vector<1x64xf32>
    %130 = vector.extract_strided_slice %16 {offsets = [0, 63], sizes = [1, 1], strides = [1, 1]} : vector<1x64xf32> to vector<1x1xf32>
    %131 = vector.extract_strided_slice %16 {offsets = [0, 0], sizes = [1, 63], strides = [1, 1]} : vector<1x64xf32> to vector<1x63xf32>
    %132 = tpu.concatenate %130, %131 in 1 : vector<1x1xf32>, vector<1x63xf32> -> vector<1x64xf32>
    %133 = arith.mulf %132, %0 : vector<1x64xf32>
    %134 = arith.maximumf %129, %133 : vector<1x64xf32>
    %135 = arith.maximumf %125, %134 : vector<1x64xf32>
    %136 = vector.extract_strided_slice %120 {offsets = [0, 63], sizes = [1, 1], strides = [1, 1]} : vector<1x64xf32> to vector<1x1xf32>
    %137 = vector.extract_strided_slice %120 {offsets = [0, 0], sizes = [1, 63], strides = [1, 1]} : vector<1x64xf32> to vector<1x63xf32>
    %138 = tpu.concatenate %136, %137 in 1 : vector<1x1xf32>, vector<1x63xf32> -> vector<1x64xf32>
    %139 = arith.mulf %138, %0 : vector<1x64xf32>
    %140 = arith.maximumf %135, %139 : vector<1x64xf32>
    %c0_90 = arith.constant 0 : index
    %c0_91 = arith.constant 0 : index
    %c0_92 = arith.constant 0 : index
    %141 = vector.load %arg20[%c0_90, %c0_91, %c0_92] : memref<1x1x64xf32, #tpu.memory_space<vmem>>, vector<1x1x64xf32>
    %142 = vector.shape_cast %141 : vector<1x1x64xf32> to vector<1x64xf32>
    %143 = vector.shape_cast %140 : vector<1x64xf32> to vector<1x1x64xf32>
    tpu.vector_store %arg20[%c0_90, %c0_91, %c0_92], %143 {strides = array<i32>} : memref<1x1x64xf32, #tpu.memory_space<vmem>>, vector<1x1x64xf32>,
    return
  }
  func.func @transform_0(%arg0: i32, %arg1: i32) -> (i32, i32) {
    %c0_i32 = arith.constant 0 : i32
    %c0_i32_0 = arith.constant 0 : i32
    %c0_i32_1 = arith.constant 0 : i32
    return %c0_i32, %c0_i32_0 : i32, i32
  }
  func.func @transform_1(%arg0: i32, %arg1: i32) -> (i32, i32, i32) {
    %c0_i32 = arith.constant 0 : i32
    %c0_i32_0 = arith.constant 0 : i32
    return %arg0, %c0_i32, %arg1 : i32, i32, i32
  }
  func.func @transform_2(%arg0: i32, %arg1: i32) -> (i32, i32, i32) {
    %c0_i32 = arith.constant 0 : i32
    %c0_i32_0 = arith.constant 0 : i32
    return %arg0, %c0_i32, %arg1 : i32, i32, i32
  }
  func.func @transform_3(%arg0: i32, %arg1: i32) -> (i32, i32, i32) {
    %c0_i32 = arith.constant 0 : i32
    %c0_i32_0 = arith.constant 0 : i32
    return %arg0, %c0_i32, %arg1 : i32, i32, i32
  }
  func.func @transform_4(%arg0: i32, %arg1: i32) -> (i32, i32, i32) {
    %c0_i32 = arith.constant 0 : i32
    %c0_i32_0 = arith.constant 0 : i32
    return %arg0, %c0_i32, %arg1 : i32, i32, i32
  }
  func.func @transform_5(%arg0: i32, %arg1: i32) -> (i32, i32, i32) {
    %c0_i32 = arith.constant 0 : i32
    %c0_i32_0 = arith.constant 0 : i32
    return %arg0, %c0_i32, %arg1 : i32, i32, i32
  }
  func.func @transform_6(%arg0: i32, %arg1: i32) -> (i32, i32, i32) {
    %c0_i32 = arith.constant 0 : i32
    %c0_i32_0 = arith.constant 0 : i32
    return %arg0, %c0_i32, %arg1 : i32, i32, i32
  }
  func.func @transform_7(%arg0: i32, %arg1: i32) -> (i32, i32, i32) {
    %c0_i32 = arith.constant 0 : i32
    %c0_i32_0 = arith.constant 0 : i32
    return %arg0, %c0_i32, %arg1 : i32, i32, i32
  }
  func.func @transform_8(%arg0: i32, %arg1: i32) -> (i32, i32, i32) {
    %c0_i32 = arith.constant 0 : i32
    %c0_i32_0 = arith.constant 0 : i32
    return %arg0, %c0_i32, %arg1 : i32, i32, i32
  }
  func.func @transform_9(%arg0: i32, %arg1: i32) -> (i32, i32, i32, i32) {
    %c0_i32 = arith.constant 0 : i32
    %c0_i32_0 = arith.constant 0 : i32
    %c0_i32_1 = arith.constant 0 : i32
    return %arg0, %arg1, %c0_i32, %c0_i32_0 : i32, i32, i32, i32
  }
  func.func @transform_10(%arg0: i32, %arg1: i32) -> (i32, i32, i32, i32) {
    %c0_i32 = arith.constant 0 : i32
    %c0_i32_0 = arith.constant 0 : i32
    %c0_i32_1 = arith.constant 0 : i32
    return %arg0, %arg1, %c0_i32, %c0_i32_0 : i32, i32, i32, i32
  }
  func.func @transform_11(%arg0: i32, %arg1: i32) -> (i32, i32, i32, i32) {
    %c0_i32 = arith.constant 0 : i32
    %c0_i32_0 = arith.constant 0 : i32
    %c0_i32_1 = arith.constant 0 : i32
    return %arg0, %arg1, %c0_i32, %c0_i32_0 : i32, i32, i32, i32
  }
  func.func @transform_12(%arg0: i32, %arg1: i32) -> (i32, i32, i32, i32) {
    %c0_i32 = arith.constant 0 : i32
    %c0_i32_0 = arith.constant 0 : i32
    %c0_i32_1 = arith.constant 0 : i32
    return %arg0, %arg1, %c0_i32, %c0_i32_0 : i32, i32, i32, i32
  }
  func.func @transform_13(%arg0: i32, %arg1: i32) -> (i32, i32, i32) {
    %c0_i32 = arith.constant 0 : i32
    %c0_i32_0 = arith.constant 0 : i32
    %c0_i32_1 = arith.constant 0 : i32
    %c0_i32_2 = arith.constant 0 : i32
    return %c0_i32, %c0_i32_0, %c0_i32_1 : i32, i32, i32
  }
  func.func @transform_14(%arg0: i32, %arg1: i32) -> (i32, i32) {
    %c0_i32 = arith.constant 0 : i32
    %c0_i32_0 = arith.constant 0 : i32
    %c0_i32_1 = arith.constant 0 : i32
    return %c0_i32, %c0_i32_0 : i32, i32
  }
  func.func @transform_15(%arg0: i32, %arg1: i32) -> (i32, i32) {
    %c0_i32 = arith.constant 0 : i32
    %c0_i32_0 = arith.constant 0 : i32
    %c0_i32_1 = arith.constant 0 : i32
    return %c0_i32, %c0_i32_0 : i32, i32
  }
  func.func @transform_16(%arg0: i32, %arg1: i32) -> (i32, i32) {
    %c0_i32 = arith.constant 0 : i32
    %c0_i32_0 = arith.constant 0 : i32
    %c0_i32_1 = arith.constant 0 : i32
    return %c0_i32, %c0_i32_0 : i32, i32
  }
  func.func @transform_17(%arg0: i32, %arg1: i32) -> (i32, i32, i32) {
    %c0_i32 = arith.constant 0 : i32
    %c0_i32_0 = arith.constant 0 : i32
    return %arg0, %c0_i32, %arg1 : i32, i32, i32
  }
  func.func @transform_18(%arg0: i32, %arg1: i32) -> (i32, i32, i32) {
    %c0_i32 = arith.constant 0 : i32
    %c0_i32_0 = arith.constant 0 : i32
    return %arg0, %c0_i32, %arg1 : i32, i32, i32
  }
}

</mosaic_0001>

<llo_original>
// kernel: tpu_custom_call.1
$region0: #{tpu_custom_call.1}
  #allocation0 [shape = 'u32[]', space=smem, size = 0x4, offset = 0x4, fixed_abs, tag = 'smem constant byte address 0x4 - core index']
  #allocation1 [shape = 'u32[144,128]{1,0:T(1,128)}', space=vmem, size = 0x12000, scoped, tag = 'internal scratch']
  %s0 = inlined_call_operand.vmem [shape: f32[1,64], index: 0, kind: input, shape index: {}]
  %s1 = inlined_call_operand.vmem [shape: f32[2,4,64], index: 1, kind: input, shape index: {}]
  %s2 = inlined_call_operand.vmem [shape: f32[2,4,64], index: 2, kind: input, shape index: {}]
  %s3 = inlined_call_operand.vmem [shape: f32[2,4,64], index: 3, kind: input, shape index: {}]
  %s4 = inlined_call_operand.vmem [shape: f32[2,4,64], index: 4, kind: input, shape index: {}]
  %s5 = inlined_call_operand.vmem [shape: f32[2,1,64], index: 5, kind: input, shape index: {}]
  %s6 = inlined_call_operand.vmem [shape: f32[2,1,64], index: 6, kind: input, shape index: {}]
  %s7 = inlined_call_operand.vmem [shape: f32[2,1,64], index: 7, kind: input, shape index: {}]
  %s8 = inlined_call_operand.vmem [shape: f32[2,1,64], index: 8, kind: input, shape index: {}]
  %s9 = inlined_call_operand.vmem [shape: f32[2,1,4,8], index: 9, kind: input, shape index: {}]
  %s10 = inlined_call_operand.vmem [shape: f32[2,1,4,8], index: 10, kind: input, shape index: {}]
  %s11 = inlined_call_operand.vmem [shape: f32[2,1,1,8], index: 11, kind: input, shape index: {}]
  %s12 = inlined_call_operand.vmem [shape: f32[2,1,1,8], index: 12, kind: input, shape index: {}]
  %s13 = inlined_call_operand.vmem [shape: f32[9,4,4], index: 13, kind: input, shape index: {}]
  %s14 = inlined_call_operand.vmem [shape: f32[4,1], index: 14, kind: input, shape index: {}]
  %s15 = inlined_call_operand.vmem [shape: f32[4,1], index: 15, kind: input, shape index: {}]
  %s16 = inlined_call_operand.vmem [shape: f32[4,1], index: 16, kind: input, shape index: {}]
  %s17 = inlined_call_operand.hbm [shape: f32[2,8,64], index: 17, kind: output, shape index: {0}]
  %s18 = inlined_call_operand.hbm [shape: f32[2,1,64], index: 18, kind: output, shape index: {1}]
  %19 = xla_tuple %s17, %s18
  %s20 = sld [smem:[#allocation0]]
  $region109: #{tpu_custom_call.1} parent=0
    _
  %s22 = ssub.s32 1, %s20
  %s23 = scalar_select 0, %s22, %s20
  $region1: #{tpu_custom_call.1} parent=0
    #allocation2 [shape = 'u8[8192]{0}', space=vmem, size = 0x2000, scoped, tag = 'output window, operand 0']
    #allocation3 [shape = 's32[2]{0}', space=sflag, size = 0x8, scoped, tag = 'scoped memory for tpu_custom_call.1']
    #allocation4 [shape = 'u8[1024]{0}', space=vmem, size = 0x400, scoped, tag = 'output window, operand 1']
    #allocation5 [shape = 's32[2]{0}', space=sflag, size = 0x8, scoped, tag = 'scoped memory for tpu_custom_call.1']
    %24 = vsyncpa [#allocation3], 0
    %s25 = scalar_lea.sflag [#allocation3], 1
    %26 = vsyncpa %s25, 0
    %27 = vsyncpa [#allocation5], 0
    %s28 = scalar_lea.sflag [#allocation5], 1
    %29 = vsyncpa %s28, 0
    loop: start=0, step=1, limit=4
    $region2: #{tpu_custom_call.1} parent=1 // loop_pre_header
      _
    $region3: #{tpu_custom_call.1} parent=1 // loop_header
      %s31 = sphi 0, %s35
      %p32 = scmp.ge.s32.totalorder %s31, 4
      %s38 = sphi 0, %s50
      %s39 = sphi 0, %s46
      %s40 = sphi 0, %s38
      %s41 = sphi 0, %s39
      %s42 = sphi 0, %s40
      %s43 = sphi 0, %s41
      %s51 = sphi 0, %s51
      %s53 = sphi 0, %s51
      %s54 = sphi 0, %s53
      %s68 = sphi 0, %s54
      %s76 = sphi 0, %s78
      %s79 = sphi 0, %s76
      %s80 = sphi 0, %s79
      %s96 = sphi 0, %s80
      %s104 = sphi 0, %s106
      %s107 = sphi 0, %s104
      %s108 = sphi 0, %s107
      %s124 = sphi 0, %s108
      %s132 = sphi 0, %s134
      %s135 = sphi 0, %s132
      %s136 = sphi 0, %s135
      %s152 = sphi 0, %s136
      %s160 = sphi 0, %s162
      %s163 = sphi 0, %s160
      %s164 = sphi 0, %s163
      %s180 = sphi 0, %s164
      %s188 = sphi 0, %s190
      %s191 = sphi 0, %s188
      %s192 = sphi 0, %s191
      %s208 = sphi 0, %s192
      %s216 = sphi 0, %s218
      %s219 = sphi 0, %s216
      %s220 = sphi 0, %s219
      %s236 = sphi 0, %s220
      %s244 = sphi 0, %s246
      %s247 = sphi 0, %s244
      %s248 = sphi 0, %s247
      %s264 = sphi 0, %s248
      %s272 = sphi 0, %s274
      %s275 = sphi 0, %s272
      %s276 = sphi 0, %s275
      %s292 = sphi 0, %s276
      %s300 = sphi 0, %s302
      %s303 = sphi 0, %s300
      %s304 = sphi 0, %s303
      %s320 = sphi 0, %s304
      %s328 = sphi 0, %s330
      %s331 = sphi 0, %s328
      %s332 = sphi 0, %s331
      %s348 = sphi 0, %s332
      %s356 = sphi 0, %s358
      %s359 = sphi 0, %s356
      %s360 = sphi 0, %s359
      %s376 = sphi 0, %s360
      %s384 = sphi 0, %s386
      %s387 = sphi 0, %s384
      %s388 = sphi 0, %s387
      %s404 = sphi 0, %s388
      %s408 = sphi 0, %s408
      %s410 = sphi 0, %s408
      %s411 = sphi 0, %s410
      %s425 = sphi 0, %s411
      %s429 = sphi 0, %s429
      %s431 = sphi 0, %s429
      %s432 = sphi 0, %s431
      %s446 = sphi 0, %s432
      %s450 = sphi 0, %s450
      %s452 = sphi 0, %s450
      %s453 = sphi 0, %s452
      %s467 = sphi 0, %s453
      %s471 = sphi 0, %s471
      %s473 = sphi 0, %s471
      %s474 = sphi 0, %s473
      %s488 = sphi 0, %s474
      %s496 = sphi 0, %s498
      %s499 = sphi 0, %s496
      %s500 = sphi 0, %s499
      %s516 = sphi 0, %s500
      %s524 = sphi 0, %s526
      %s527 = sphi 0, %s524
      %s528 = sphi 0, %s527
      %s544 = sphi 0, %s528
    $region4: #{tpu_custom_call.1} parent=1 // loop_header_branch
      %34 = sbr.rel (%p32) target = $region8
    $region5: #{tpu_custom_call.1} parent=1 // loop_body
      %s36 = ssub.s32 %s31, 1
      %s37 = ssub.s32 %s31, 2
      %s44 = sadd.s32 1, %s39
      %p45 = scmp.ge.s32.totalorder %s44, 1
      %s46 = scalar_select %p45, 0, %s44
      %s47 = sadd.s32 1, %s38
      %s48 = scalar_select %p45, %s47, %s38
      %p49 = scmp.ge.s32.totalorder %s48, 2
      %s50 = scalar_select %p49, 0, %s48
      %s52 = sadd.s32 %s51, 1
      %p55 = scmp.eq.s32.totalorder %s31, 1
      %p56 = scmp.ne.s32.totalorder %s51, %s53
      %p57 = scmp.eq.s32.totalorder %s31, 0
      %p58 = por %p56, %p57
      %p59 = scmp.ne.s32.totalorder %s51, %s53
      %p60 = scmp.eq.s32.totalorder %s36, 1
      %p61 = por %p59, %p60
      %p62 = scmp.ne.s32.totalorder %s53, %s54
      %p63 = scmp.eq.s32.totalorder %s36, 0
      %p64 = por %p62, %p63
      %p65 = scmp.ne.s32.totalorder %s53, %s54
      %p66 = scmp.eq.s32.totalorder %s37, 1
      %p67 = por %p65, %p66
      %p69 = scmp.ne.s32.totalorder %s54, %s68
      %p70 = scmp.eq.s32.totalorder %s37, 0
      %p71 = por %p69, %p70
      %s72 = ssub.s32 %s38, %s50
      %s73 = ssub.s32 %s39, %s46
      %s74 = sor.u32 %s72, %s73
      %p75 = scmp.eq.s32.totalorder %s74, 0
      %s77 = sadd.s32 %s76, 1
      %s78 = scalar_select %p75, %s76, %s77
      %p81 = pneg %p75
      %p82 = scmp.eq.s32.totalorder %s31, 1
      %p83 = por %p81, %p82
      %p84 = scmp.ne.s32.totalorder %s76, %s79
      %p85 = scmp.eq.s32.totalorder %s31, 0
      %p86 = por %p84, %p85
      %p87 = scmp.ne.s32.totalorder %s76, %s79
      %p88 = scmp.eq.s32.totalorder %s36, 1
      %p89 = por %p87, %p88
      %p90 = scmp.ne.s32.totalorder %s79, %s80
      %p91 = scmp.eq.s32.totalorder %s36, 0
      %p92 = por %p90, %p91
      %p93 = scmp.ne.s32.totalorder %s79, %s80
      %p94 = scmp.eq.s32.totalorder %s37, 1
      %p95 = por %p93, %p94
      %p97 = scmp.ne.s32.totalorder %s80, %s96
      %p98 = scmp.eq.s32.totalorder %s37, 0
      %p99 = por %p97, %p98
      %s100 = ssub.s32 %s38, %s50
      %s101 = ssub.s32 %s39, %s46
      %s102 = sor.u32 %s100, %s101
      %p103 = scmp.eq.s32.totalorder %s102, 0
      %s105 = sadd.s32 %s104, 1
      %s106 = scalar_select %p103, %s104, %s105
      %p109 = pneg %p103
      %p110 = scmp.eq.s32.totalorder %s31, 1
      %p111 = por %p109, %p110
      %p112 = scmp.ne.s32.totalorder %s104, %s107
      %p113 = scmp.eq.s32.totalorder %s31, 0
      %p114 = por %p112, %p113
      %p115 = scmp.ne.s32.totalorder %s104, %s107
      %p116 = scmp.eq.s32.totalorder %s36, 1
      %p117 = por %p115, %p116
      %p118 = scmp.ne.s32.totalorder %s107, %s108
      %p119 = scmp.eq.s32.totalorder %s36, 0
      %p120 = por %p118, %p119
      %p121 = scmp.ne.s32.totalorder %s107, %s108
      %p122 = scmp.eq.s32.totalorder %s37, 1
      %p123 = por %p121, %p122
      %p125 = scmp.ne.s32.totalorder %s108, %s124
      %p126 = scmp.eq.s32.totalorder %s37, 0
      %p127 = por %p125, %p126
      %s128 = ssub.s32 %s38, %s50
      %s129 = ssub.s32 %s39, %s46
      %s130 = sor.u32 %s128, %s129
      %p131 = scmp.eq.s32.totalorder %s130, 0
      %s133 = sadd.s32 %s132, 1
      %s134 = scalar_select %p131, %s132, %s133
      %p137 = pneg %p131
      %p138 = scmp.eq.s32.totalorder %s31, 1
      %p139 = por %p137, %p138
      %p140 = scmp.ne.s32.totalorder %s132, %s135
      %p141 = scmp.eq.s32.totalorder %s31, 0
      %p142 = por %p140, %p141
      %p143 = scmp.ne.s32.totalorder %s132, %s135
      %p144 = scmp.eq.s32.totalorder %s36, 1
      %p145 = por %p143, %p144
      %p146 = scmp.ne.s32.totalorder %s135, %s136
      %p147 = scmp.eq.s32.totalorder %s36, 0
      %p148 = por %p146, %p147
      %p149 = scmp.ne.s32.totalorder %s135, %s136
      %p150 = scmp.eq.s32.totalorder %s37, 1
      %p151 = por %p149, %p150
      %p153 = scmp.ne.s32.totalorder %s136, %s152
      %p154 = scmp.eq.s32.totalorder %s37, 0
      %p155 = por %p153, %p154
      %s156 = ssub.s32 %s38, %s50
      %s157 = ssub.s32 %s39, %s46
      %s158 = sor.u32 %s156, %s157
      %p159 = scmp.eq.s32.totalorder %s158, 0
      %s161 = sadd.s32 %s160, 1
      %s162 = scalar_select %p159, %s160, %s161
      %p165 = pneg %p159
      %p166 = scmp.eq.s32.totalorder %s31, 1
      %p167 = por %p165, %p166
      %p168 = scmp.ne.s32.totalorder %s160, %s163
      %p169 = scmp.eq.s32.totalorder %s31, 0
      %p170 = por %p168, %p169
      %p171 = scmp.ne.s32.totalorder %s160, %s163
      %p172 = scmp.eq.s32.totalorder %s36, 1
      %p173 = por %p171, %p172
      %p174 = scmp.ne.s32.totalorder %s163, %s164
      %p175 = scmp.eq.s32.totalorder %s36, 0
      %p176 = por %p174, %p175
      %p177 = scmp.ne.s32.totalorder %s163, %s164
      %p178 = scmp.eq.s32.totalorder %s37, 1
      %p179 = por %p177, %p178
      %p181 = scmp.ne.s32.totalorder %s164, %s180
      %p182 = scmp.eq.s32.totalorder %s37, 0
      %p183 = por %p181, %p182
      %s184 = ssub.s32 %s38, %s50
      %s185 = ssub.s32 %s39, %s46
      %s186 = sor.u32 %s184, %s185
      %p187 = scmp.eq.s32.totalorder %s186, 0
      %s189 = sadd.s32 %s188, 1
      %s190 = scalar_select %p187, %s188, %s189
      %p193 = pneg %p187
      %p194 = scmp.eq.s32.totalorder %s31, 1
      %p195 = por %p193, %p194
      %p196 = scmp.ne.s32.totalorder %s188, %s191
      %p197 = scmp.eq.s32.totalorder %s31, 0
      %p198 = por %p196, %p197
      %p199 = scmp.ne.s32.totalorder %s188, %s191
      %p200 = scmp.eq.s32.totalorder %s36, 1
      %p201 = por %p199, %p200
      %p202 = scmp.ne.s32.totalorder %s191, %s192
      %p203 = scmp.eq.s32.totalorder %s36, 0
      %p204 = por %p202, %p203
      %p205 = scmp.ne.s32.totalorder %s191, %s192
      %p206 = scmp.eq.s32.totalorder %s37, 1
      %p207 = por %p205, %p206
      %p209 = scmp.ne.s32.totalorder %s192, %s208
      %p210 = scmp.eq.s32.totalorder %s37, 0
      %p211 = por %p209, %p210
      %s212 = ssub.s32 %s38, %s50
      %s213 = ssub.s32 %s39, %s46
      %s214 = sor.u32 %s212, %s213
      %p215 = scmp.eq.s32.totalorder %s214, 0
      %s217 = sadd.s32 %s216, 1
      %s218 = scalar_select %p215, %s216, %s217
      %p221 = pneg %p215
      %p222 = scmp.eq.s32.totalorder %s31, 1
      %p223 = por %p221, %p222
      %p224 = scmp.ne.s32.totalorder %s216, %s219
      %p225 = scmp.eq.s32.totalorder %s31, 0
      %p226 = por %p224, %p225
      %p227 = scmp.ne.s32.totalorder %s216, %s219
      %p228 = scmp.eq.s32.totalorder %s36, 1
      %p229 = por %p227, %p228
      %p230 = scmp.ne.s32.totalorder %s219, %s220
      %p231 = scmp.eq.s32.totalorder %s36, 0
      %p232 = por %p230, %p231
      %p233 = scmp.ne.s32.totalorder %s219, %s220
      %p234 = scmp.eq.s32.totalorder %s37, 1
      %p235 = por %p233, %p234
      %p237 = scmp.ne.s32.totalorder %s220, %s236
      %p238 = scmp.eq.s32.totalorder %s37, 0
      %p239 = por %p237, %p238
      %s240 = ssub.s32 %s38, %s50
      %s241 = ssub.s32 %s39, %s46
      %s242 = sor.u32 %s240, %s241
      %p243 = scmp.eq.s32.totalorder %s242, 0
      %s245 = sadd.s32 %s244, 1
      %s246 = scalar_select %p243, %s244, %s245
      %p249 = pneg %p243
      %p250 = scmp.eq.s32.totalorder %s31, 1
      %p251 = por %p249, %p250
      %p252 = scmp.ne.s32.totalorder %s244, %s247
      %p253 = scmp.eq.s32.totalorder %s31, 0
      %p254 = por %p252, %p253
      %p255 = scmp.ne.s32.totalorder %s244, %s247
      %p256 = scmp.eq.s32.totalorder %s36, 1
      %p257 = por %p255, %p256
      %p258 = scmp.ne.s32.totalorder %s247, %s248
      %p259 = scmp.eq.s32.totalorder %s36, 0
      %p260 = por %p258, %p259
      %p261 = scmp.ne.s32.totalorder %s247, %s248
      %p262 = scmp.eq.s32.totalorder %s37, 1
      %p263 = por %p261, %p262
      %p265 = scmp.ne.s32.totalorder %s248, %s264
      %p266 = scmp.eq.s32.totalorder %s37, 0
      %p267 = por %p265, %p266
      %s268 = ssub.s32 %s38, %s50
      %s269 = ssub.s32 %s39, %s46
      %s270 = sor.u32 %s268, %s269
      %p271 = scmp.eq.s32.totalorder %s270, 0
      %s273 = sadd.s32 %s272, 1
      %s274 = scalar_select %p271, %s272, %s273
      %p277 = pneg %p271
      %p278 = scmp.eq.s32.totalorder %s31, 1
      %p279 = por %p277, %p278
      %p280 = scmp.ne.s32.totalorder %s272, %s275
      %p281 = scmp.eq.s32.totalorder %s31, 0
      %p282 = por %p280, %p281
      %p283 = scmp.ne.s32.totalorder %s272, %s275
      %p284 = scmp.eq.s32.totalorder %s36, 1
      %p285 = por %p283, %p284
      %p286 = scmp.ne.s32.totalorder %s275, %s276
      %p287 = scmp.eq.s32.totalorder %s36, 0
      %p288 = por %p286, %p287
      %p289 = scmp.ne.s32.totalorder %s275, %s276
      %p290 = scmp.eq.s32.totalorder %s37, 1
      %p291 = por %p289, %p290
      %p293 = scmp.ne.s32.totalorder %s276, %s292
      %p294 = scmp.eq.s32.totalorder %s37, 0
      %p295 = por %p293, %p294
      %s296 = ssub.s32 %s38, %s50
      %s297 = ssub.s32 %s39, %s46
      %s298 = sor.u32 %s296, %s297
      %p299 = scmp.eq.s32.totalorder %s298, 0
      %s301 = sadd.s32 %s300, 1
      %s302 = scalar_select %p299, %s300, %s301
      %p305 = pneg %p299
      %p306 = scmp.eq.s32.totalorder %s31, 1
      %p307 = por %p305, %p306
      %p308 = scmp.ne.s32.totalorder %s300, %s303
      %p309 = scmp.eq.s32.totalorder %s31, 0
      %p310 = por %p308, %p309
      %p311 = scmp.ne.s32.totalorder %s300, %s303
      %p312 = scmp.eq.s32.totalorder %s36, 1
      %p313 = por %p311, %p312
      %p314 = scmp.ne.s32.totalorder %s303, %s304
      %p315 = scmp.eq.s32.totalorder %s36, 0
      %p316 = por %p314, %p315
      %p317 = scmp.ne.s32.totalorder %s303, %s304
      %p318 = scmp.eq.s32.totalorder %s37, 1
      %p319 = por %p317, %p318
      %p321 = scmp.ne.s32.totalorder %s304, %s320
      %p322 = scmp.eq.s32.totalorder %s37, 0
      %p323 = por %p321, %p322
      %s324 = ssub.s32 %s38, %s50
      %s325 = ssub.s32 %s39, %s46
      %s326 = sor.u32 %s324, %s325
      %p327 = scmp.eq.s32.totalorder %s326, 0
      %s329 = sadd.s32 %s328, 1
      %s330 = scalar_select %p327, %s328, %s329
      %p333 = pneg %p327
      %p334 = scmp.eq.s32.totalorder %s31, 1
      %p335 = por %p333, %p334
      %p336 = scmp.ne.s32.totalorder %s328, %s331
      %p337 = scmp.eq.s32.totalorder %s31, 0
      %p338 = por %p336, %p337
      %p339 = scmp.ne.s32.totalorder %s328, %s331
      %p340 = scmp.eq.s32.totalorder %s36, 1
      %p341 = por %p339, %p340
      %p342 = scmp.ne.s32.totalorder %s331, %s332
      %p343 = scmp.eq.s32.totalorder %s36, 0
      %p344 = por %p342, %p343
      %p345 = scmp.ne.s32.totalorder %s331, %s332
      %p346 = scmp.eq.s32.totalorder %s37, 1
      %p347 = por %p345, %p346
      %p349 = scmp.ne.s32.totalorder %s332, %s348
      %p350 = scmp.eq.s32.totalorder %s37, 0
      %p351 = por %p349, %p350
      %s352 = ssub.s32 %s38, %s50
      %s353 = ssub.s32 %s39, %s46
      %s354 = sor.u32 %s352, %s353
      %p355 = scmp.eq.s32.totalorder %s354, 0
      %s357 = sadd.s32 %s356, 1
      %s358 = scalar_select %p355, %s356, %s357
      %p361 = pneg %p355
      %p362 = scmp.eq.s32.totalorder %s31, 1
      %p363 = por %p361, %p362
      %p364 = scmp.ne.s32.totalorder %s356, %s359
      %p365 = scmp.eq.s32.totalorder %s31, 0
      %p366 = por %p364, %p365
      %p367 = scmp.ne.s32.totalorder %s356, %s359
      %p368 = scmp.eq.s32.totalorder %s36, 1
      %p369 = por %p367, %p368
      %p370 = scmp.ne.s32.totalorder %s359, %s360
      %p371 = scmp.eq.s32.totalorder %s36, 0
      %p372 = por %p370, %p371
      %p373 = scmp.ne.s32.totalorder %s359, %s360
      %p374 = scmp.eq.s32.totalorder %s37, 1
      %p375 = por %p373, %p374
      %p377 = scmp.ne.s32.totalorder %s360, %s376
      %p378 = scmp.eq.s32.totalorder %s37, 0
      %p379 = por %p377, %p378
      %s380 = ssub.s32 %s38, %s50
      %s381 = ssub.s32 %s39, %s46
      %s382 = sor.u32 %s380, %s381
      %p383 = scmp.eq.s32.totalorder %s382, 0
      %s385 = sadd.s32 %s384, 1
      %s386 = scalar_select %p383, %s384, %s385
      %p389 = pneg %p383
      %p390 = scmp.eq.s32.totalorder %s31, 1
      %p391 = por %p389, %p390
      %p392 = scmp.ne.s32.totalorder %s384, %s387
      %p393 = scmp.eq.s32.totalorder %s31, 0
      %p394 = por %p392, %p393
      %p395 = scmp.ne.s32.totalorder %s384, %s387
      %p396 = scmp.eq.s32.totalorder %s36, 1
      %p397 = por %p395, %p396
      %p398 = scmp.ne.s32.totalorder %s387, %s388
      %p399 = scmp.eq.s32.totalorder %s36, 0
      %p400 = por %p398, %p399
      %p401 = scmp.ne.s32.totalorder %s387, %s388
      %p402 = scmp.eq.s32.totalorder %s37, 1
      %p403 = por %p401, %p402
      %p405 = scmp.ne.s32.totalorder %s388, %s404
      %p406 = scmp.eq.s32.totalorder %s37, 0
      %p407 = por %p405, %p406
      %s409 = sadd.s32 %s408, 1
      %p412 = scmp.eq.s32.totalorder %s31, 1
      %p413 = scmp.ne.s32.totalorder %s408, %s410
      %p414 = scmp.eq.s32.totalorder %s31, 0
      %p415 = por %p413, %p414
      %p416 = scmp.ne.s32.totalorder %s408, %s410
      %p417 = scmp.eq.s32.totalorder %s36, 1
      %p418 = por %p416, %p417
      %p419 = scmp.ne.s32.totalorder %s410, %s411
      %p420 = scmp.eq.s32.totalorder %s36, 0
      %p421 = por %p419, %p420
      %p422 = scmp.ne.s32.totalorder %s410, %s411
      %p423 = scmp.eq.s32.totalorder %s37, 1
      %p424 = por %p422, %p423
      %p426 = scmp.ne.s32.totalorder %s411, %s425
      %p427 = scmp.eq.s32.totalorder %s37, 0
      %p428 = por %p426, %p427
      %s430 = sadd.s32 %s429, 1
      %p433 = scmp.eq.s32.totalorder %s31, 1
      %p434 = scmp.ne.s32.totalorder %s429, %s431
      %p435 = scmp.eq.s32.totalorder %s31, 0
      %p436 = por %p434, %p435
      %p437 = scmp.ne.s32.totalorder %s429, %s431
      %p438 = scmp.eq.s32.totalorder %s36, 1
      %p439 = por %p437, %p438
      %p440 = scmp.ne.s32.totalorder %s431, %s432
      %p441 = scmp.eq.s32.totalorder %s36, 0
      %p442 = por %p440, %p441
      %p443 = scmp.ne.s32.totalorder %s431, %s432
      %p444 = scmp.eq.s32.totalorder %s37, 1
      %p445 = por %p443, %p444
      %p447 = scmp.ne.s32.totalorder %s432, %s446
      %p448 = scmp.eq.s32.totalorder %s37, 0
      %p449 = por %p447, %p448
      %s451 = sadd.s32 %s450, 1
      %p454 = scmp.eq.s32.totalorder %s31, 1
      %p455 = scmp.ne.s32.totalorder %s450, %s452
      %p456 = scmp.eq.s32.totalorder %s31, 0
      %p457 = por %p455, %p456
      %p458 = scmp.ne.s32.totalorder %s450, %s452
      %p459 = scmp.eq.s32.totalorder %s36, 1
      %p460 = por %p458, %p459
      %p461 = scmp.ne.s32.totalorder %s452, %s453
      %p462 = scmp.eq.s32.totalorder %s36, 0
      %p463 = por %p461, %p462
      %p464 = scmp.ne.s32.totalorder %s452, %s453
      %p465 = scmp.eq.s32.totalorder %s37, 1
      %p466 = por %p464, %p465
      %p468 = scmp.ne.s32.totalorder %s453, %s467
      %p469 = scmp.eq.s32.totalorder %s37, 0
      %p470 = por %p468, %p469
      %s472 = sadd.s32 %s471, 1
      %p475 = scmp.eq.s32.totalorder %s31, 1
      %p476 = scmp.ne.s32.totalorder %s471, %s473
      %p477 = scmp.eq.s32.totalorder %s31, 0
      %p478 = por %p476, %p477
      %p479 = scmp.ne.s32.totalorder %s471, %s473
      %p480 = scmp.eq.s32.totalorder %s36, 1
      %p481 = por %p479, %p480
      %p482 = scmp.ne.s32.totalorder %s473, %s474
      %p483 = scmp.eq.s32.totalorder %s36, 0
      %p484 = por %p482, %p483
      %p485 = scmp.ne.s32.totalorder %s473, %s474
      %p486 = scmp.eq.s32.totalorder %s37, 1
      %p487 = por %p485, %p486
      %p489 = scmp.ne.s32.totalorder %s474, %s488
      %p490 = scmp.eq.s32.totalorder %s37, 0
      %p491 = por %p489, %p490
      %s492 = ssub.s32 %s38, %s50
      %s493 = ssub.s32 %s39, %s46
      %s494 = sor.u32 %s492, %s493
      %p495 = scmp.eq.s32.totalorder %s494, 0
      %s497 = sadd.s32 %s496, 1
      %s498 = scalar_select %p495, %s496, %s497
      %p501 = pneg %p495
      %p502 = scmp.eq.s32.totalorder %s31, 1
      %p503 = por %p501, %p502
      %p504 = scmp.ne.s32.totalorder %s496, %s499
      %p505 = scmp.eq.s32.totalorder %s31, 0
      %p506 = por %p504, %p505
      %p507 = scmp.ne.s32.totalorder %s496, %s499
      %p508 = scmp.eq.s32.totalorder %s36, 1
      %p509 = por %p507, %p508
      %p510 = scmp.ne.s32.totalorder %s499, %s500
      %p511 = scmp.eq.s32.totalorder %s36, 0
      %p512 = por %p510, %p511
      %p513 = scmp.ne.s32.totalorder %s499, %s500
      %p514 = scmp.eq.s32.totalorder %s37, 1
      %p515 = por %p513, %p514
      %p517 = scmp.ne.s32.totalorder %s500, %s516
      %p518 = scmp.eq.s32.totalorder %s37, 0
      %p519 = por %p517, %p518
      %s520 = ssub.s32 %s38, %s50
      %s521 = ssub.s32 %s39, %s46
      %s522 = sor.u32 %s520, %s521
      %p523 = scmp.eq.s32.totalorder %s522, 0
      %s525 = sadd.s32 %s524, 1
      %s526 = scalar_select %p523, %s524, %s525
      %p529 = pneg %p523
      %p530 = scmp.eq.s32.totalorder %s31, 1
      %p531 = por %p529, %p530
      %p532 = scmp.ne.s32.totalorder %s524, %s527
      %p533 = scmp.eq.s32.totalorder %s31, 0
      %p534 = por %p532, %p533
      %p535 = scmp.ne.s32.totalorder %s524, %s527
      %p536 = scmp.eq.s32.totalorder %s36, 1
      %p537 = por %p535, %p536
      %p538 = scmp.ne.s32.totalorder %s527, %s528
      %p539 = scmp.eq.s32.totalorder %s36, 0
      %p540 = por %p538, %p539
      %p541 = scmp.ne.s32.totalorder %s527, %s528
      %p542 = scmp.eq.s32.totalorder %s37, 1
      %p543 = por %p541, %p542
      %p545 = scmp.ne.s32.totalorder %s528, %s544
      %p546 = scmp.eq.s32.totalorder %s37, 0
      %p547 = por %p545, %p546
      %p548 = scmp.le.s32.totalorder 1, %s31
      %p549 = scmp.lt.s32.totalorder %s31, 3
      %p550 = pnand %p548, %p549
      %p551 = pneg %p550
      // Predicated region
      $region9: #{tpu_custom_call.1} parent=5 // pred_check
        _
      $region10: #{tpu_custom_call.1} parent=5 // pred_check_branch
        %553 = sbr.rel (%p550) target = $region12
      $region11: #{tpu_custom_call.1} parent=5 // pred_region
        %s554 = ssub.s32 %s31, 1
        // Predicated region
        $region13: #{tpu_custom_call.1} parent=11 // pred_check
          %p555 = pneg %p64
        $region14: #{tpu_custom_call.1} parent=11 // pred_check_branch
          %557 = sbr.rel (%p555) target = $region16
        $region15: #{tpu_custom_call.1} parent=11 // pred_region
          _
        $region16: #{tpu_custom_call.1} parent=11 // pred_fallthru
          _
        // Predicated region
        $region17: #{tpu_custom_call.1} parent=11 // pred_check
          %p558 = pneg %p421
        $region18: #{tpu_custom_call.1} parent=11 // pred_check_branch
          %560 = sbr.rel (%p558) target = $region20
        $region19: #{tpu_custom_call.1} parent=11 // pred_region
          _
        $region20: #{tpu_custom_call.1} parent=11 // pred_fallthru
          _
        // Predicated region
        $region21: #{tpu_custom_call.1} parent=11 // pred_check
          %p561 = pneg %p442
        $region22: #{tpu_custom_call.1} parent=11 // pred_check_branch
          %563 = sbr.rel (%p561) target = $region24
        $region23: #{tpu_custom_call.1} parent=11 // pred_region
          _
        $region24: #{tpu_custom_call.1} parent=11 // pred_fallthru
          _
        // Predicated region
        $region25: #{tpu_custom_call.1} parent=11 // pred_check
          %p564 = pneg %p463
        $region26: #{tpu_custom_call.1} parent=11 // pred_check_branch
          %566 = sbr.rel (%p564) target = $region28
        $region27: #{tpu_custom_call.1} parent=11 // pred_region
          _
        $region28: #{tpu_custom_call.1} parent=11 // pred_fallthru
          _
        // Predicated region
        $region29: #{tpu_custom_call.1} parent=11 // pred_check
          %p567 = pneg %p484
        $region30: #{tpu_custom_call.1} parent=11 // pred_check_branch
          %569 = sbr.rel (%p567) target = $region32
        $region31: #{tpu_custom_call.1} parent=11 // pred_region
          _
        $region32: #{tpu_custom_call.1} parent=11 // pred_fallthru
          _
      $region12: #{tpu_custom_call.1} parent=5 // pred_fallthru
        _
      %p570 = scmp.lt.s32.totalorder %s31, 2
      // Predicated region
      $region33: #{tpu_custom_call.1} parent=5 // pred_check
        %p571 = pneg %p570
      $region34: #{tpu_custom_call.1} parent=5 // pred_check_branch
        %573 = sbr.rel (%p571) target = $region36
      $region35: #{tpu_custom_call.1} parent=5 // pred_region
        // Predicated region
        $region37: #{tpu_custom_call.1} parent=35 // pred_check
          %p574 = pneg %p86
        $region38: #{tpu_custom_call.1} parent=35 // pred_check_branch
          %576 = sbr.rel (%p574) target = $region40
        $region39: #{tpu_custom_call.1} parent=35 // pred_region
          %p577 = scmp.lt.s32.totalorder %s38, 1
          %s578 = scalar_select %p577, %s38, 1
          %p579 = scmp.lt.s32.totalorder %s39, 0
          %s580 = scalar_select %p579, %s39, 0
          %s581 = sadd.s32 %s580, %s578
          %s582 = smul.addr %s581, 4
          %s583 = scalar_lea.vmem %s1, %s582
        $region40: #{tpu_custom_call.1} parent=35 // pred_fallthru
          _
        // Predicated region
        $region41: #{tpu_custom_call.1} parent=35 // pred_check
          %p584 = pneg %p114
        $region42: #{tpu_custom_call.1} parent=35 // pred_check_branch
          %586 = sbr.rel (%p584) target = $region44
        $region43: #{tpu_custom_call.1} parent=35 // pred_region
          %p587 = scmp.lt.s32.totalorder %s38, 1
          %s588 = scalar_select %p587, %s38, 1
          %p589 = scmp.lt.s32.totalorder %s39, 0
          %s590 = scalar_select %p589, %s39, 0
          %s591 = sadd.s32 %s590, %s588
          %s592 = smul.addr %s591, 4
          %s593 = scalar_lea.vmem %s2, %s592
        $region44: #{tpu_custom_call.1} parent=35 // pred_fallthru
          _
        // Predicated region
        $region45: #{tpu_custom_call.1} parent=35 // pred_check
          %p594 = pneg %p142
        $region46: #{tpu_custom_call.1} parent=35 // pred_check_branch
          %596 = sbr.rel (%p594) target = $region48
        $region47: #{tpu_custom_call.1} parent=35 // pred_region
          %p597 = scmp.lt.s32.totalorder %s38, 1
          %s598 = scalar_select %p597, %s38, 1
          %p599 = scmp.lt.s32.totalorder %s39, 0
          %s600 = scalar_select %p599, %s39, 0
          %s601 = sadd.s32 %s600, %s598
          %s602 = smul.addr %s601, 4
          %s603 = scalar_lea.vmem %s3, %s602
        $region48: #{tpu_custom_call.1} parent=35 // pred_fallthru
          _
        // Predicated region
        $region49: #{tpu_custom_call.1} parent=35 // pred_check
          %p604 = pneg %p170
        $region50: #{tpu_custom_call.1} parent=35 // pred_check_branch
          %606 = sbr.rel (%p604) target = $region52
        $region51: #{tpu_custom_call.1} parent=35 // pred_region
          %p607 = scmp.lt.s32.totalorder %s38, 1
          %s608 = scalar_select %p607, %s38, 1
          %p609 = scmp.lt.s32.totalorder %s39, 0
          %s610 = scalar_select %p609, %s39, 0
          %s611 = sadd.s32 %s610, %s608
          %s612 = smul.addr %s611, 4
          %s613 = scalar_lea.vmem %s4, %s612
        $region52: #{tpu_custom_call.1} parent=35 // pred_fallthru
          _
        // Predicated region
        $region53: #{tpu_custom_call.1} parent=35 // pred_check
          %p614 = pneg %p198
        $region54: #{tpu_custom_call.1} parent=35 // pred_check_branch
          %616 = sbr.rel (%p614) target = $region56
        $region55: #{tpu_custom_call.1} parent=35 // pred_region
          %p617 = scmp.lt.s32.totalorder %s38, 1
          %s618 = scalar_select %p617, %s38, 1
          %p619 = scmp.lt.s32.totalorder %s39, 0
          %s620 = scalar_select %p619, %s39, 0
          %s621 = sadd.s32 %s620, %s618
          %s622 = scalar_lea.vmem %s5, %s621
        $region56: #{tpu_custom_call.1} parent=35 // pred_fallthru
          _
        // Predicated region
        $region57: #{tpu_custom_call.1} parent=35 // pred_check
          %p623 = pneg %p226
        $region58: #{tpu_custom_call.1} parent=35 // pred_check_branch
          %625 = sbr.rel (%p623) target = $region60
        $region59: #{tpu_custom_call.1} parent=35 // pred_region
          %p626 = scmp.lt.s32.totalorder %s38, 1
          %s627 = scalar_select %p626, %s38, 1
          %p628 = scmp.lt.s32.totalorder %s39, 0
          %s629 = scalar_select %p628, %s39, 0
          %s630 = sadd.s32 %s629, %s627
          %s631 = scalar_lea.vmem %s6, %s630
        $region60: #{tpu_custom_call.1} parent=35 // pred_fallthru
          _
        // Predicated region
        $region61: #{tpu_custom_call.1} parent=35 // pred_check
          %p632 = pneg %p254
        $region62: #{tpu_custom_call.1} parent=35 // pred_check_branch
          %634 = sbr.rel (%p632) target = $region64
        $region63: #{tpu_custom_call.1} parent=35 // pred_region
          %p635 = scmp.lt.s32.totalorder %s38, 1
          %s636 = scalar_select %p635, %s38, 1
          %p637 = scmp.lt.s32.totalorder %s39, 0
          %s638 = scalar_select %p637, %s39, 0
          %s639 = sadd.s32 %s638, %s636
          %s640 = scalar_lea.vmem %s7, %s639
        $region64: #{tpu_custom_call.1} parent=35 // pred_fallthru
          _
        // Predicated region
        $region65: #{tpu_custom_call.1} parent=35 // pred_check
          %p641 = pneg %p282
        $region66: #{tpu_custom_call.1} parent=35 // pred_check_branch
          %643 = sbr.rel (%p641) target = $region68
        $region67: #{tpu_custom_call.1} parent=35 // pred_region
          %p644 = scmp.lt.s32.totalorder %s38, 1
          %s645 = scalar_select %p644, %s38, 1
          %p646 = scmp.lt.s32.totalorder %s39, 0
          %s647 = scalar_select %p646, %s39, 0
          %s648 = sadd.s32 %s647, %s645
          %s649 = scalar_lea.vmem %s8, %s648
        $region68: #{tpu_custom_call.1} parent=35 // pred_fallthru
          _
        // Predicated region
        $region69: #{tpu_custom_call.1} parent=35 // pred_check
          %p650 = pneg %p310
        $region70: #{tpu_custom_call.1} parent=35 // pred_check_branch
          %652 = sbr.rel (%p650) target = $region72
        $region71: #{tpu_custom_call.1} parent=35 // pred_region
          %p653 = scmp.lt.s32.totalorder %s38, 1
          %s654 = scalar_select %p653, %s38, 1
          %p655 = scmp.lt.s32.totalorder %s39, 0
          %s656 = scalar_select %p655, %s39, 0
          %s657 = sadd.s32 %s656, %s654
          %s658 = smul.addr %s657, 4
          %s659 = scalar_lea.vmem %s9, %s658
        $region72: #{tpu_custom_call.1} parent=35 // pred_fallthru
          _
        // Predicated region
        $region73: #{tpu_custom_call.1} parent=35 // pred_check
          %p660 = pneg %p338
        $region74: #{tpu_custom_call.1} parent=35 // pred_check_branch
          %662 = sbr.rel (%p660) target = $region76
        $region75: #{tpu_custom_call.1} parent=35 // pred_region
          %p663 = scmp.lt.s32.totalorder %s38, 1
          %s664 = scalar_select %p663, %s38, 1
          %p665 = scmp.lt.s32.totalorder %s39, 0
          %s666 = scalar_select %p665, %s39, 0
          %s667 = sadd.s32 %s666, %s664
          %s668 = smul.addr %s667, 4
          %s669 = scalar_lea.vmem %s10, %s668
        $region76: #{tpu_custom_call.1} parent=35 // pred_fallthru
          _
        // Predicated region
        $region77: #{tpu_custom_call.1} parent=35 // pred_check
          %p670 = pneg %p366
        $region78: #{tpu_custom_call.1} parent=35 // pred_check_branch
          %672 = sbr.rel (%p670) target = $region80
        $region79: #{tpu_custom_call.1} parent=35 // pred_region
          %p673 = scmp.lt.s32.totalorder %s38, 1
          %s674 = scalar_select %p673, %s38, 1
          %p675 = scmp.lt.s32.totalorder %s39, 0
          %s676 = scalar_select %p675, %s39, 0
          %s677 = sadd.s32 %s676, %s674
          %s678 = scalar_lea.vmem %s11, %s677
        $region80: #{tpu_custom_call.1} parent=35 // pred_fallthru
          _
        // Predicated region
        $region81: #{tpu_custom_call.1} parent=35 // pred_check
          %p679 = pneg %p394
        $region82: #{tpu_custom_call.1} parent=35 // pred_check_branch
          %681 = sbr.rel (%p679) target = $region84
        $region83: #{tpu_custom_call.1} parent=35 // pred_region
          %p682 = scmp.lt.s32.totalorder %s38, 1
          %s683 = scalar_select %p682, %s38, 1
          %p684 = scmp.lt.s32.totalorder %s39, 0
          %s685 = scalar_select %p684, %s39, 0
          %s686 = sadd.s32 %s685, %s683
          %s687 = scalar_lea.vmem %s12, %s686
        $region84: #{tpu_custom_call.1} parent=35 // pred_fallthru
          _
      $region36: #{tpu_custom_call.1} parent=5 // pred_fallthru
        _
      %p688 = scmp.le.s32.totalorder 1, %s31
      %p689 = scmp.lt.s32.totalorder %s31, 3
      %p690 = pnand %p688, %p689
      %p691 = pneg %p690
      // Predicated region
      $region85: #{tpu_custom_call.1} parent=5 // pred_check
        _
      $region86: #{tpu_custom_call.1} parent=5 // pred_check_branch
        %693 = sbr.rel (%p690) target = $region88
      $region87: #{tpu_custom_call.1} parent=5 // pred_region
        %s694 = ssub.s32 %s31, 1
        %p695 = pneg %p64
        %p696 = pneg %p61
        %p697 = scmp.lt.s32.totalorder %s40, 1
        %s698 = scalar_select %p697, %s40, 1
        %p699 = scmp.lt.s32.totalorder %s41, 0
        %s700 = scalar_select %p699, %s41, 0
        %s701 = sadd.s32 %s700, %s698
        %s702 = smul.addr %s701, 4
        %s703 = scalar_lea.vmem %s1, %s702
        %p704 = pneg %p92
        %p705 = pneg %p89
        %p706 = scmp.lt.s32.totalorder %s40, 1
        %s707 = scalar_select %p706, %s40, 1
        %p708 = scmp.lt.s32.totalorder %s41, 0
        %s709 = scalar_select %p708, %s41, 0
        %s710 = sadd.s32 %s709, %s707
        %s711 = smul.addr %s710, 4
        %s712 = scalar_lea.vmem %s2, %s711
        %p713 = pneg %p120
        %p714 = pneg %p117
        %p715 = scmp.lt.s32.totalorder %s40, 1
        %s716 = scalar_select %p715, %s40, 1
        %p717 = scmp.lt.s32.totalorder %s41, 0
        %s718 = scalar_select %p717, %s41, 0
        %s719 = sadd.s32 %s718, %s716
        %s720 = smul.addr %s719, 4
        %s721 = scalar_lea.vmem %s3, %s720
        %p722 = pneg %p148
        %p723 = pneg %p145
        %p724 = scmp.lt.s32.totalorder %s40, 1
        %s725 = scalar_select %p724, %s40, 1
        %p726 = scmp.lt.s32.totalorder %s41, 0
        %s727 = scalar_select %p726, %s41, 0
        %s728 = sadd.s32 %s727, %s725
        %s729 = smul.addr %s728, 4
        %s730 = scalar_lea.vmem %s4, %s729
        %p731 = pneg %p176
        %p732 = pneg %p173
        %p733 = scmp.lt.s32.totalorder %s40, 1
        %s734 = scalar_select %p733, %s40, 1
        %p735 = scmp.lt.s32.totalorder %s41, 0
        %s736 = scalar_select %p735, %s41, 0
        %s737 = sadd.s32 %s736, %s734
        %s738 = scalar_lea.vmem %s5, %s737
        %p739 = pneg %p204
        %p740 = pneg %p201
        %p741 = scmp.lt.s32.totalorder %s40, 1
        %s742 = scalar_select %p741, %s40, 1
        %p743 = scmp.lt.s32.totalorder %s41, 0
        %s744 = scalar_select %p743, %s41, 0
        %s745 = sadd.s32 %s744, %s742
        %s746 = scalar_lea.vmem %s6, %s745
        %p747 = pneg %p232
        %p748 = pneg %p229
        %p749 = scmp.lt.s32.totalorder %s40, 1
        %s750 = scalar_select %p749, %s40, 1
        %p751 = scmp.lt.s32.totalorder %s41, 0
        %s752 = scalar_select %p751, %s41, 0
        %s753 = sadd.s32 %s752, %s750
        %s754 = scalar_lea.vmem %s7, %s753
        %p755 = pneg %p260
        %p756 = pneg %p257
        %p757 = scmp.lt.s32.totalorder %s40, 1
        %s758 = scalar_select %p757, %s40, 1
        %p759 = scmp.lt.s32.totalorder %s41, 0
        %s760 = scalar_select %p759, %s41, 0
        %s761 = sadd.s32 %s760, %s758
        %s762 = scalar_lea.vmem %s8, %s761
        %p763 = pneg %p288
        %p764 = pneg %p285
        %p765 = scmp.lt.s32.totalorder %s40, 1
        %s766 = scalar_select %p765, %s40, 1
        %p767 = scmp.lt.s32.totalorder %s41, 0
        %s768 = scalar_select %p767, %s41, 0
        %s769 = sadd.s32 %s768, %s766
        %s770 = smul.addr %s769, 4
        %s771 = scalar_lea.vmem %s9, %s770
        %p772 = pneg %p316
        %p773 = pneg %p313
        %p774 = scmp.lt.s32.totalorder %s40, 1
        %s775 = scalar_select %p774, %s40, 1
        %p776 = scmp.lt.s32.totalorder %s41, 0
        %s777 = scalar_select %p776, %s41, 0
        %s778 = sadd.s32 %s777, %s775
        %s779 = smul.addr %s778, 4
        %s780 = scalar_lea.vmem %s10, %s779
        %p781 = pneg %p344
        %p782 = pneg %p341
        %p783 = scmp.lt.s32.totalorder %s40, 1
        %s784 = scalar_select %p783, %s40, 1
        %p785 = scmp.lt.s32.totalorder %s41, 0
        %s786 = scalar_select %p785, %s41, 0
        %s787 = sadd.s32 %s786, %s784
        %s788 = scalar_lea.vmem %s11, %s787
        %p789 = pneg %p372
        %p790 = pneg %p369
        %p791 = scmp.lt.s32.totalorder %s40, 1
        %s792 = scalar_select %p791, %s40, 1
        %p793 = scmp.lt.s32.totalorder %s41, 0
        %s794 = scalar_select %p793, %s41, 0
        %s795 = sadd.s32 %s794, %s792
        %s796 = scalar_lea.vmem %s12, %s795
        %p797 = pneg %p400
        %p798 = pneg %p397
        %p799 = pneg %p421
        %p800 = pneg %p418
        %p801 = pneg %p442
        %p802 = pneg %p439
        %p803 = pneg %p463
        %p804 = pneg %p460
        %p805 = pneg %p484
        %p806 = pneg %p481
        %p807 = pneg %p512
        %p808 = pneg %p509
        %s809 = sand.u32 %s499, 1
        %s810 = scalar_lea.sflag [#allocation3], %s809
        %s811 = sand.u32 %s499, 1
        %s812 = smul.addr %s811, 8
        %s813 = scalar_lea.vmem [#allocation2], %s812
        %p814 = pneg %p540
        %p815 = pneg %p537
        %s816 = sand.u32 %s527, 1
        %s817 = scalar_lea.sflag [#allocation5], %s816
        %s818 = sand.u32 %s527, 1
        %s819 = scalar_lea.vmem [#allocation4], %s818
        %p820 = scmp.lt.s32.totalorder %s40, 1
        %s821 = scalar_select %p820, %s40, 1
        %p822 = scmp.lt.s32.totalorder %s41, 0
        %s823 = scalar_select %p822, %s41, 0
        %s824 = sadd.s32 %s823, %s821
        %s825 = smul.addr %s824, 4
        %s826 = scalar_lea.vmem %s1, %s825
        %p827 = scmp.lt.s32.totalorder %s40, 1
        %s828 = scalar_select %p827, %s40, 1
        %p829 = scmp.lt.s32.totalorder %s41, 0
        %s830 = scalar_select %p829, %s41, 0
        %s831 = sadd.s32 %s830, %s828
        %s832 = smul.addr %s831, 4
        %s833 = scalar_lea.vmem %s2, %s832
        %p834 = scmp.lt.s32.totalorder %s40, 1
        %s835 = scalar_select %p834, %s40, 1
        %p836 = scmp.lt.s32.totalorder %s41, 0
        %s837 = scalar_select %p836, %s41, 0
        %s838 = sadd.s32 %s837, %s835
        %s839 = smul.addr %s838, 4
        %s840 = scalar_lea.vmem %s3, %s839
        %p841 = scmp.lt.s32.totalorder %s40, 1
        %s842 = scalar_select %p841, %s40, 1
        %p843 = scmp.lt.s32.totalorder %s41, 0
        %s844 = scalar_select %p843, %s41, 0
        %s845 = sadd.s32 %s844, %s842
        %s846 = smul.addr %s845, 4
        %s847 = scalar_lea.vmem %s4, %s846
        %p848 = scmp.lt.s32.totalorder %s40, 1
        %s849 = scalar_select %p848, %s40, 1
        %p850 = scmp.lt.s32.totalorder %s41, 0
        %s851 = scalar_select %p850, %s41, 0
        %s852 = sadd.s32 %s851, %s849
        %s853 = scalar_lea.vmem %s5, %s852
        %p854 = scmp.lt.s32.totalorder %s40, 1
        %s855 = scalar_select %p854, %s40, 1
        %p856 = scmp.lt.s32.totalorder %s41, 0
        %s857 = scalar_select %p856, %s41, 0
        %s858 = sadd.s32 %s857, %s855
        %s859 = scalar_lea.vmem %s6, %s858
        %p860 = scmp.lt.s32.totalorder %s40, 1
        %s861 = scalar_select %p860, %s40, 1
        %p862 = scmp.lt.s32.totalorder %s41, 0
        %s863 = scalar_select %p862, %s41, 0
        %s864 = sadd.s32 %s863, %s861
        %s865 = scalar_lea.vmem %s7, %s864
        %p866 = scmp.lt.s32.totalorder %s40, 1
        %s867 = scalar_select %p866, %s40, 1
        %p868 = scmp.lt.s32.totalorder %s41, 0
        %s869 = scalar_select %p868, %s41, 0
        %s870 = sadd.s32 %s869, %s867
        %s871 = scalar_lea.vmem %s8, %s870
        %p872 = scmp.lt.s32.totalorder %s40, 1
        %s873 = scalar_select %p872, %s40, 1
        %p874 = scmp.lt.s32.totalorder %s41, 0
        %s875 = scalar_select %p874, %s41, 0
        %s876 = sadd.s32 %s875, %s873
        %s877 = smul.addr %s876, 4
        %s878 = scalar_lea.vmem %s9, %s877
        %p879 = scmp.lt.s32.totalorder %s40, 1
        %s880 = scalar_select %p879, %s40, 1
        %p881 = scmp.lt.s32.totalorder %s41, 0
        %s882 = scalar_select %p881, %s41, 0
        %s883 = sadd.s32 %s882, %s880
        %s884 = smul.addr %s883, 4
        %s885 = scalar_lea.vmem %s10, %s884
        %p886 = scmp.lt.s32.totalorder %s40, 1
        %s887 = scalar_select %p886, %s40, 1
        %p888 = scmp.lt.s32.totalorder %s41, 0
        %s889 = scalar_select %p888, %s41, 0
        %s890 = sadd.s32 %s889, %s887
        %s891 = scalar_lea.vmem %s11, %s890
        %p892 = scmp.lt.s32.totalorder %s40, 1
        %s893 = scalar_select %p892, %s40, 1
        %p894 = scmp.lt.s32.totalorder %s41, 0
        %s895 = scalar_select %p894, %s41, 0
        %s896 = sadd.s32 %s895, %s893
        %s897 = scalar_lea.vmem %s12, %s896
        %v898 = vld [vmem:[%s0] sm:$0x1]
        %v899 = vld [vmem:[%s826] sm:$0xf]
        %v900 = vld [vmem:[%s833] sm:$0xf]
        %v901 = vld [vmem:[%s840] sm:$0xf]
        %v902 = vld [vmem:[%s847] sm:$0xf]
        %v903 = vld [vmem:[%s853] sm:$0x1]
        %v904 = vld [vmem:[%s859] sm:$0x1]
        %v905 = vld [vmem:[%s865] sm:$0x1]
        %v906 = vld [vmem:[%s871] sm:$0x1]
        %v908 = vlaneseq
        %v909 = vshrl.u32 %v908, 7
        %v910 = vsub.s32 0, %v909
        %v911 = vrot.slane %v903, %v910
        %v913 = vmul.f32 %v899, %v911
        %v915 = vlaneseq
        %v916 = vshrl.u32 %v915, 7
        %v917 = vsub.s32 0, %v916
        %v918 = vrot.slane %v904, %v917
        %v920 = vmul.f32 %v900, %v918
        %v922 = vlaneseq
        %v923 = vshrl.u32 %v922, 7
        %v924 = vsub.s32 0, %v923
        %v925 = vrot.slane %v905, %v924
        %v927 = vmul.f32 %v901, %v925
        %v929 = vlaneseq
        %v930 = vshrl.u32 %v929, 7
        %v931 = vsub.s32 0, %v930
        %v932 = vrot.slane %v906, %v931
        %v934 = vmul.f32 %v902, %v932
        %v935 = vld [vmem:[%s878] sm:$0xf]
        %v936 = vld [vmem:[%s891] sm:$0x1]
        %v938 = vlaneseq
        %v939 = vshrl.u32 %v938, 7
        %v940 = vsub.s32 0, %v939
        %v941 = vrot.slane %v936, %v940
        %v943 = vmul.f32 %v935, %v941
        %v944 = vld [vmem:[%s885] sm:$0xf]
        %v945 = vld [vmem:[%s897] sm:$0x1]
        %v947 = vlaneseq
        %v948 = vshrl.u32 %v947, 7
        %v949 = vsub.s32 0, %v948
        %v950 = vrot.slane %v945, %v949
        %v952 = vmul.f32 %v944, %v950
        %954 = vrot.lane.b32.xlu0 %v927, 8
        %v955 = vpop.permute.xlu0 %954
        %vm957 = vcmask 64512
        %v958 = vsel %vm957, %v943, %v955
        %960 = vrot.lane.b32.xlu0 %v934, 8
        %v961 = vpop.permute.xlu0 %960
        %v963 = vsel %vm957, %v952, %v961
        %s964 = scalar_lea.vmem %s13, 16
        %v965 = vld [vmem:[%s964] sm:$0xf]
        %s966 = scalar_lea.vmem %s13, 20
        %v967 = vld [vmem:[%s966] sm:$0xf]
        %vm968 = vcmask 31744
        %v970 = vsel %vm968, %v967, 0
        %vm972 = vcmask 1043456
        %v974 = vsel %vm972, %v920, 0
        %976 = vmatprep.subr.mxu0 0.0
        %977 = vmatpush1.msra.mxu0 %v974
        %978 = vmatprep.subr.mxu0 0.0
        %979 = vmatpush1.msra.mxu0 0.0
        %980 = vmatprep.subr.mxu0 0.0
        %981 = vmatpush1.msra.mxu0 0.0
        %982 = vmatprep.subr.mxu0 0.0
        %983 = vmatpush1.msra.mxu0 0.0
        %984 = vmatprep.subr.mxu0 0.0
        %985 = vmatpush1.msra.mxu0 0.0
        %986 = vmatprep.subr.mxu0 0.0
        %987 = vmatpush1.msra.mxu0 0.0
        %988 = vmatprep.subr.mxu0 0.0
        %989 = vmatpush1.msra.mxu0 0.0
        %990 = vmatprep.subr.mxu0 0.0
        %991 = vmatpush1.msra.mxu0 0.0
        %992 = vmatprep.subr.mxu0 0.0
        %993 = vmatpush1.msra.mxu0 0.0
        %994 = vmatprep.subr.mxu0 0.0
        %995 = vmatpush1.msra.mxu0 0.0
        %996 = vmatprep.subr.mxu0 0.0
        %997 = vmatpush1.msra.mxu0 0.0
        %998 = vmatprep.subr.mxu0 0.0
        %999 = vmatpush1.msra.mxu0 0.0
        %1000 = vmatprep.subr.mxu0 0.0
        %1001 = vmatpush1.msra.mxu0 0.0
        %1002 = vmatprep.subr.mxu0 0.0
        %1003 = vmatpush1.msra.mxu0 0.0
        %1004 = vmatprep.subr.mxu0 0.0
        %1005 = vmatpush1.msra.mxu0 0.0
        %1006 = vmatprep.subr.mxu0 0.0
        %1007 = vmatpush1.msra.mxu0 0.0
        %1008 = vmatprep.subr.mxu0 0.0
        %1009 = vmatpush1.msra.mxu0 0.0
        %1010 = vmatprep.subr.mxu0 0.0
        %1011 = vmatpush1.msra.mxu0 0.0
        %1012 = vmatprep.subr.mxu0 0.0
        %1013 = vmatpush1.msra.mxu0 0.0
        %1014 = vmatprep.subr.mxu0 0.0
        %1015 = vmatpush1.msra.mxu0 0.0
        %1016 = vmatprep.subr.mxu0 0.0
        %1017 = vmatpush1.msra.mxu0 0.0
        %1018 = vmatprep.subr.mxu0 0.0
        %1019 = vmatpush1.msra.mxu0 0.0
        %1020 = vmatprep.subr.mxu0 0.0
        %1021 = vmatpush1.msra.mxu0 0.0
        %1022 = vmatprep.subr.mxu0 0.0
        %1023 = vmatpush1.msra.mxu0 0.0
        %1024 = vmatprep.subr.mxu0 0.0
        %1025 = vmatpush1.msra.mxu0 0.0
        %1026 = vmatprep.subr.mxu0 0.0
        %1027 = vmatpush1.msra.mxu0 0.0
        %1028 = vmatprep.subr.mxu0 0.0
        %1029 = vmatpush1.msra.mxu0 0.0
        %1030 = vmatprep.subr.mxu0 0.0
        %1031 = vmatpush1.msra.mxu0 0.0
        %1032 = vmatprep.subr.mxu0 0.0
        %1033 = vmatpush1.msra.mxu0 0.0
        %1034 = vmatprep.subr.mxu0 0.0
        %1035 = vmatpush1.msra.mxu0 0.0
        %1036 = vmatprep.subr.mxu0 0.0
        %1037 = vmatpush1.msra.mxu0 0.0
        %1038 = vmatprep.subr.mxu0 0.0
        %1039 = vmatpush1.msra.mxu0 0.0
        %1040 = vmatprep.mubr.f32.mxu0 0.0
        %1041 = vmatmul.mubr.f32.gmra.mrb[0].mxu0 %v970
        %v1042 = vpop.f32.mrb[0].mxu0
        %v1043 = vadd.f32 0.0, %v1042
        %v1044 = vpop.f32.mrb[0].mxu0
        %1045 = vdwg.mxu0
        %v1047 = vsel %vm968, %v965, 0
        %v1050 = vsel %vm972, %v913, 0
        %1052 = vmatprep.subr.mxu0 0.0
        %1053 = vmatpush1.msra.mxu0 %v1050
        %1054 = vmatprep.subr.mxu0 0.0
        %1055 = vmatpush1.msra.mxu0 0.0
        %1056 = vmatprep.subr.mxu0 0.0
        %1057 = vmatpush1.msra.mxu0 0.0
        %1058 = vmatprep.subr.mxu0 0.0
        %1059 = vmatpush1.msra.mxu0 0.0
        %1060 = vmatprep.subr.mxu0 0.0
        %1061 = vmatpush1.msra.mxu0 0.0
        %1062 = vmatprep.subr.mxu0 0.0
        %1063 = vmatpush1.msra.mxu0 0.0
        %1064 = vmatprep.subr.mxu0 0.0
        %1065 = vmatpush1.msra.mxu0 0.0
        %1066 = vmatprep.subr.mxu0 0.0
        %1067 = vmatpush1.msra.mxu0 0.0
        %1068 = vmatprep.subr.mxu0 0.0
        %1069 = vmatpush1.msra.mxu0 0.0
        %1070 = vmatprep.subr.mxu0 0.0
        %1071 = vmatpush1.msra.mxu0 0.0
        %1072 = vmatprep.subr.mxu0 0.0
        %1073 = vmatpush1.msra.mxu0 0.0
        %1074 = vmatprep.subr.mxu0 0.0
        %1075 = vmatpush1.msra.mxu0 0.0
        %1076 = vmatprep.subr.mxu0 0.0
        %1077 = vmatpush1.msra.mxu0 0.0
        %1078 = vmatprep.subr.mxu0 0.0
        %1079 = vmatpush1.msra.mxu0 0.0
        %1080 = vmatprep.subr.mxu0 0.0
        %1081 = vmatpush1.msra.mxu0 0.0
        %1082 = vmatprep.subr.mxu0 0.0
        %1083 = vmatpush1.msra.mxu0 0.0
        %1084 = vmatprep.subr.mxu0 0.0
        %1085 = vmatpush1.msra.mxu0 0.0
        %1086 = vmatprep.subr.mxu0 0.0
        %1087 = vmatpush1.msra.mxu0 0.0
        %1088 = vmatprep.subr.mxu0 0.0
        %1089 = vmatpush1.msra.mxu0 0.0
        %1090 = vmatprep.subr.mxu0 0.0
        %1091 = vmatpush1.msra.mxu0 0.0
        %1092 = vmatprep.subr.mxu0 0.0
        %1093 = vmatpush1.msra.mxu0 0.0
        %1094 = vmatprep.subr.mxu0 0.0
        %1095 = vmatpush1.msra.mxu0 0.0
        %1096 = vmatprep.subr.mxu0 0.0
        %1097 = vmatpush1.msra.mxu0 0.0
        %1098 = vmatprep.subr.mxu0 0.0
        %1099 = vmatpush1.msra.mxu0 0.0
        %1100 = vmatprep.subr.mxu0 0.0
        %1101 = vmatpush1.msra.mxu0 0.0
        %1102 = vmatprep.subr.mxu0 0.0
        %1103 = vmatpush1.msra.mxu0 0.0
        %1104 = vmatprep.subr.mxu0 0.0
        %1105 = vmatpush1.msra.mxu0 0.0
        %1106 = vmatprep.subr.mxu0 0.0
        %1107 = vmatpush1.msra.mxu0 0.0
        %1108 = vmatprep.subr.mxu0 0.0
        %1109 = vmatpush1.msra.mxu0 0.0
        %1110 = vmatprep.subr.mxu0 0.0
        %1111 = vmatpush1.msra.mxu0 0.0
        %1112 = vmatprep.subr.mxu0 0.0
        %1113 = vmatpush1.msra.mxu0 0.0
        %1114 = vmatprep.subr.mxu0 0.0
        %1115 = vmatpush1.msra.mxu0 0.0
        %1116 = vmatprep.mubr.f32.mxu0 0.0
        %1117 = vmatmul.mubr.f32.gmra.mrb[0].mxu0 %v1047
        %v1118 = vpop.f32.mrb[0].mxu0
        %v1119 = vadd.f32 %v1043, %v1118
        %v1120 = vpop.f32.mrb[0].mxu0
        %1121 = vdwg.mxu0
        %1122 = vrot.lane.b32.xlu0 %v920, 65
        %v1123 = vpop.permute.xlu0 %1122
        %1125 = vrot.lane.b32.xlu0 %v920, 1
        %v1126 = vpop.permute.xlu0 %1125
        %vm1128 = vcmask 7168
        %v1129 = vsel %vm1128, %v1123, %v1126
        %v1131 = vlaneseq
        %v1132 = vshrl.u32 %v1131, 7
        %v1133 = vsub.s32 0, %v1132
        %v1134 = vrot.slane %v898, %v1133
        %v1136 = vmul.f32 %v1129, %v1134
        %s1137 = scalar_lea.vmem %s13, 12
        %v1138 = vld [vmem:[%s1137] sm:$0xf]
        %v1140 = vsel %vm968, %v1138, 0
        %v1143 = vsel %vm972, %v1136, 0
        %1145 = vmatprep.subr.mxu0 0.0
        %1146 = vmatpush1.msra.mxu0 %v1143
        %1147 = vmatprep.subr.mxu0 0.0
        %1148 = vmatpush1.msra.mxu0 0.0
        %1149 = vmatprep.subr.mxu0 0.0
        %1150 = vmatpush1.msra.mxu0 0.0
        %1151 = vmatprep.subr.mxu0 0.0
        %1152 = vmatpush1.msra.mxu0 0.0
        %1153 = vmatprep.subr.mxu0 0.0
        %1154 = vmatpush1.msra.mxu0 0.0
        %1155 = vmatprep.subr.mxu0 0.0
        %1156 = vmatpush1.msra.mxu0 0.0
        %1157 = vmatprep.subr.mxu0 0.0
        %1158 = vmatpush1.msra.mxu0 0.0
        %1159 = vmatprep.subr.mxu0 0.0
        %1160 = vmatpush1.msra.mxu0 0.0
        %1161 = vmatprep.subr.mxu0 0.0
        %1162 = vmatpush1.msra.mxu0 0.0
        %1163 = vmatprep.subr.mxu0 0.0
        %1164 = vmatpush1.msra.mxu0 0.0
        %1165 = vmatprep.subr.mxu0 0.0
        %1166 = vmatpush1.msra.mxu0 0.0
        %1167 = vmatprep.subr.mxu0 0.0
        %1168 = vmatpush1.msra.mxu0 0.0
        %1169 = vmatprep.subr.mxu0 0.0
        %1170 = vmatpush1.msra.mxu0 0.0
        %1171 = vmatprep.subr.mxu0 0.0
        %1172 = vmatpush1.msra.mxu0 0.0
        %1173 = vmatprep.subr.mxu0 0.0
        %1174 = vmatpush1.msra.mxu0 0.0
        %1175 = vmatprep.subr.mxu0 0.0
        %1176 = vmatpush1.msra.mxu0 0.0
        %1177 = vmatprep.subr.mxu0 0.0
        %1178 = vmatpush1.msra.mxu0 0.0
        %1179 = vmatprep.subr.mxu0 0.0
        %1180 = vmatpush1.msra.mxu0 0.0
        %1181 = vmatprep.subr.mxu0 0.0
        %1182 = vmatpush1.msra.mxu0 0.0
        %1183 = vmatprep.subr.mxu0 0.0
        %1184 = vmatpush1.msra.mxu0 0.0
        %1185 = vmatprep.subr.mxu0 0.0
        %1186 = vmatpush1.msra.mxu0 0.0
        %1187 = vmatprep.subr.mxu0 0.0
        %1188 = vmatpush1.msra.mxu0 0.0
        %1189 = vmatprep.subr.mxu0 0.0
        %1190 = vmatpush1.msra.mxu0 0.0
        %1191 = vmatprep.subr.mxu0 0.0
        %1192 = vmatpush1.msra.mxu0 0.0
        %1193 = vmatprep.subr.mxu0 0.0
        %1194 = vmatpush1.msra.mxu0 0.0
        %1195 = vmatprep.subr.mxu0 0.0
        %1196 = vmatpush1.msra.mxu0 0.0
        %1197 = vmatprep.subr.mxu0 0.0
        %1198 = vmatpush1.msra.mxu0 0.0
        %1199 = vmatprep.subr.mxu0 0.0
        %1200 = vmatpush1.msra.mxu0 0.0
        %1201 = vmatprep.subr.mxu0 0.0
        %1202 = vmatpush1.msra.mxu0 0.0
        %1203 = vmatprep.subr.mxu0 0.0
        %1204 = vmatpush1.msra.mxu0 0.0
        %1205 = vmatprep.subr.mxu0 0.0
        %1206 = vmatpush1.msra.mxu0 0.0
        %1207 = vmatprep.subr.mxu0 0.0
        %1208 = vmatpush1.msra.mxu0 0.0
        %1209 = vmatprep.mubr.f32.mxu0 0.0
        %1210 = vmatmul.mubr.f32.gmra.mrb[0].mxu0 %v1140
        %v1211 = vpop.f32.mrb[0].mxu0
        %v1212 = vadd.f32 0.0, %v1211
        %v1213 = vpop.f32.mrb[0].mxu0
        %1214 = vdwg.mxu0
        %v1215 = vadd.f32 %v1119, %v1212
        %s1216 = scalar_lea.vmem %s13, 28
        %v1217 = vld [vmem:[%s1216] sm:$0xf]
        %v1219 = vsel %vm968, %v1217, 0
        %v1221 = vsel %vm972, %v927, 0
        %1223 = vmatprep.subr.mxu0 0.0
        %1224 = vmatpush1.msra.mxu0 %v1221
        %1225 = vmatprep.subr.mxu0 0.0
        %1226 = vmatpush1.msra.mxu0 0.0
        %1227 = vmatprep.subr.mxu0 0.0
        %1228 = vmatpush1.msra.mxu0 0.0
        %1229 = vmatprep.subr.mxu0 0.0
        %1230 = vmatpush1.msra.mxu0 0.0
        %1231 = vmatprep.subr.mxu0 0.0
        %1232 = vmatpush1.msra.mxu0 0.0
        %1233 = vmatprep.subr.mxu0 0.0
        %1234 = vmatpush1.msra.mxu0 0.0
        %1235 = vmatprep.subr.mxu0 0.0
        %1236 = vmatpush1.msra.mxu0 0.0
        %1237 = vmatprep.subr.mxu0 0.0
        %1238 = vmatpush1.msra.mxu0 0.0
        %1239 = vmatprep.subr.mxu0 0.0
        %1240 = vmatpush1.msra.mxu0 0.0
        %1241 = vmatprep.subr.mxu0 0.0
        %1242 = vmatpush1.msra.mxu0 0.0
        %1243 = vmatprep.subr.mxu0 0.0
        %1244 = vmatpush1.msra.mxu0 0.0
        %1245 = vmatprep.subr.mxu0 0.0
        %1246 = vmatpush1.msra.mxu0 0.0
        %1247 = vmatprep.subr.mxu0 0.0
        %1248 = vmatpush1.msra.mxu0 0.0
        %1249 = vmatprep.subr.mxu0 0.0
        %1250 = vmatpush1.msra.mxu0 0.0
        %1251 = vmatprep.subr.mxu0 0.0
        %1252 = vmatpush1.msra.mxu0 0.0
        %1253 = vmatprep.subr.mxu0 0.0
        %1254 = vmatpush1.msra.mxu0 0.0
        %1255 = vmatprep.subr.mxu0 0.0
        %1256 = vmatpush1.msra.mxu0 0.0
        %1257 = vmatprep.subr.mxu0 0.0
        %1258 = vmatpush1.msra.mxu0 0.0
        %1259 = vmatprep.subr.mxu0 0.0
        %1260 = vmatpush1.msra.mxu0 0.0
        %1261 = vmatprep.subr.mxu0 0.0
        %1262 = vmatpush1.msra.mxu0 0.0
        %1263 = vmatprep.subr.mxu0 0.0
        %1264 = vmatpush1.msra.mxu0 0.0
        %1265 = vmatprep.subr.mxu0 0.0
        %1266 = vmatpush1.msra.mxu0 0.0
        %1267 = vmatprep.subr.mxu0 0.0
        %1268 = vmatpush1.msra.mxu0 0.0
        %1269 = vmatprep.subr.mxu0 0.0
        %1270 = vmatpush1.msra.mxu0 0.0
        %1271 = vmatprep.subr.mxu0 0.0
        %1272 = vmatpush1.msra.mxu0 0.0
        %1273 = vmatprep.subr.mxu0 0.0
        %1274 = vmatpush1.msra.mxu0 0.0
        %1275 = vmatprep.subr.mxu0 0.0
        %1276 = vmatpush1.msra.mxu0 0.0
        %1277 = vmatprep.subr.mxu0 0.0
        %1278 = vmatpush1.msra.mxu0 0.0
        %1279 = vmatprep.subr.mxu0 0.0
        %1280 = vmatpush1.msra.mxu0 0.0
        %1281 = vmatprep.subr.mxu0 0.0
        %1282 = vmatpush1.msra.mxu0 0.0
        %1283 = vmatprep.subr.mxu0 0.0
        %1284 = vmatpush1.msra.mxu0 0.0
        %1285 = vmatprep.subr.mxu0 0.0
        %1286 = vmatpush1.msra.mxu0 0.0
        %1287 = vmatprep.mubr.f32.mxu0 0.0
        %1288 = vmatmul.mubr.f32.gmra.mrb[0].mxu0 %v1219
        %v1289 = vpop.f32.mrb[0].mxu0
        %v1290 = vadd.f32 0.0, %v1289
        %v1291 = vpop.f32.mrb[0].mxu0
        %1292 = vdwg.mxu0
        %v1293 = vadd.f32 %v1215, %v1290
        %s1294 = scalar_lea.vmem %s13, 32
        %v1295 = vld [vmem:[%s1294] sm:$0xf]
        %v1297 = vsel %vm968, %v1295, 0
        %v1299 = vsel %vm972, %v934, 0
        %1301 = vmatprep.subr.mxu0 0.0
        %1302 = vmatpush1.msra.mxu0 %v1299
        %1303 = vmatprep.subr.mxu0 0.0
        %1304 = vmatpush1.msra.mxu0 0.0
        %1305 = vmatprep.subr.mxu0 0.0
        %1306 = vmatpush1.msra.mxu0 0.0
        %1307 = vmatprep.subr.mxu0 0.0
        %1308 = vmatpush1.msra.mxu0 0.0
        %1309 = vmatprep.subr.mxu0 0.0
        %1310 = vmatpush1.msra.mxu0 0.0
        %1311 = vmatprep.subr.mxu0 0.0
        %1312 = vmatpush1.msra.mxu0 0.0
        %1313 = vmatprep.subr.mxu0 0.0
        %1314 = vmatpush1.msra.mxu0 0.0
        %1315 = vmatprep.subr.mxu0 0.0
        %1316 = vmatpush1.msra.mxu0 0.0
        %1317 = vmatprep.subr.mxu0 0.0
        %1318 = vmatpush1.msra.mxu0 0.0
        %1319 = vmatprep.subr.mxu0 0.0
        %1320 = vmatpush1.msra.mxu0 0.0
        %1321 = vmatprep.subr.mxu0 0.0
        %1322 = vmatpush1.msra.mxu0 0.0
        %1323 = vmatprep.subr.mxu0 0.0
        %1324 = vmatpush1.msra.mxu0 0.0
        %1325 = vmatprep.subr.mxu0 0.0
        %1326 = vmatpush1.msra.mxu0 0.0
        %1327 = vmatprep.subr.mxu0 0.0
        %1328 = vmatpush1.msra.mxu0 0.0
        %1329 = vmatprep.subr.mxu0 0.0
        %1330 = vmatpush1.msra.mxu0 0.0
        %1331 = vmatprep.subr.mxu0 0.0
        %1332 = vmatpush1.msra.mxu0 0.0
        %1333 = vmatprep.subr.mxu0 0.0
        %1334 = vmatpush1.msra.mxu0 0.0
        %1335 = vmatprep.subr.mxu0 0.0
        %1336 = vmatpush1.msra.mxu0 0.0
        %1337 = vmatprep.subr.mxu0 0.0
        %1338 = vmatpush1.msra.mxu0 0.0
        %1339 = vmatprep.subr.mxu0 0.0
        %1340 = vmatpush1.msra.mxu0 0.0
        %1341 = vmatprep.subr.mxu0 0.0
        %1342 = vmatpush1.msra.mxu0 0.0
        %1343 = vmatprep.subr.mxu0 0.0
        %1344 = vmatpush1.msra.mxu0 0.0
        %1345 = vmatprep.subr.mxu0 0.0
        %1346 = vmatpush1.msra.mxu0 0.0
        %1347 = vmatprep.subr.mxu0 0.0
        %1348 = vmatpush1.msra.mxu0 0.0
        %1349 = vmatprep.subr.mxu0 0.0
        %1350 = vmatpush1.msra.mxu0 0.0
        %1351 = vmatprep.subr.mxu0 0.0
        %1352 = vmatpush1.msra.mxu0 0.0
        %1353 = vmatprep.subr.mxu0 0.0
        %1354 = vmatpush1.msra.mxu0 0.0
        %1355 = vmatprep.subr.mxu0 0.0
        %1356 = vmatpush1.msra.mxu0 0.0
        %1357 = vmatprep.subr.mxu0 0.0
        %1358 = vmatpush1.msra.mxu0 0.0
        %1359 = vmatprep.subr.mxu0 0.0
        %1360 = vmatpush1.msra.mxu0 0.0
        %1361 = vmatprep.subr.mxu0 0.0
        %1362 = vmatpush1.msra.mxu0 0.0
        %1363 = vmatprep.subr.mxu0 0.0
        %1364 = vmatpush1.msra.mxu0 0.0
        %1365 = vmatprep.mubr.f32.mxu0 0.0
        %1366 = vmatmul.mubr.f32.gmra.mrb[0].mxu0 %v1297
        %v1367 = vpop.f32.mrb[0].mxu0
        %v1368 = vadd.f32 0.0, %v1367
        %v1369 = vpop.f32.mrb[0].mxu0
        %1370 = vdwg.mxu0
        %v1371 = vadd.f32 %v1293, %v1368
        %1372 = vrot.lane.b32.xlu0 %v934, 65
        %v1373 = vpop.permute.xlu0 %1372
        %1375 = vrot.lane.b32.xlu0 %v934, 1
        %v1376 = vpop.permute.xlu0 %1375
        %v1378 = vsel %vm1128, %v1373, %v1376
        %v1379 = vmul.f32 %v1378, %v1134
        %s1380 = scalar_lea.vmem %s13, 24
        %v1381 = vld [vmem:[%s1380] sm:$0xf]
        %v1383 = vsel %vm968, %v1381, 0
        %v1386 = vsel %vm972, %v1379, 0
        %1388 = vmatprep.subr.mxu0 0.0
        %1389 = vmatpush1.msra.mxu0 %v1386
        %1390 = vmatprep.subr.mxu0 0.0
        %1391 = vmatpush1.msra.mxu0 0.0
        %1392 = vmatprep.subr.mxu0 0.0
        %1393 = vmatpush1.msra.mxu0 0.0
        %1394 = vmatprep.subr.mxu0 0.0
        %1395 = vmatpush1.msra.mxu0 0.0
        %1396 = vmatprep.subr.mxu0 0.0
        %1397 = vmatpush1.msra.mxu0 0.0
        %1398 = vmatprep.subr.mxu0 0.0
        %1399 = vmatpush1.msra.mxu0 0.0
        %1400 = vmatprep.subr.mxu0 0.0
        %1401 = vmatpush1.msra.mxu0 0.0
        %1402 = vmatprep.subr.mxu0 0.0
        %1403 = vmatpush1.msra.mxu0 0.0
        %1404 = vmatprep.subr.mxu0 0.0
        %1405 = vmatpush1.msra.mxu0 0.0
        %1406 = vmatprep.subr.mxu0 0.0
        %1407 = vmatpush1.msra.mxu0 0.0
        %1408 = vmatprep.subr.mxu0 0.0
        %1409 = vmatpush1.msra.mxu0 0.0
        %1410 = vmatprep.subr.mxu0 0.0
        %1411 = vmatpush1.msra.mxu0 0.0
        %1412 = vmatprep.subr.mxu0 0.0
        %1413 = vmatpush1.msra.mxu0 0.0
        %1414 = vmatprep.subr.mxu0 0.0
        %1415 = vmatpush1.msra.mxu0 0.0
        %1416 = vmatprep.subr.mxu0 0.0
        %1417 = vmatpush1.msra.mxu0 0.0
        %1418 = vmatprep.subr.mxu0 0.0
        %1419 = vmatpush1.msra.mxu0 0.0
        %1420 = vmatprep.subr.mxu0 0.0
        %1421 = vmatpush1.msra.mxu0 0.0
        %1422 = vmatprep.subr.mxu0 0.0
        %1423 = vmatpush1.msra.mxu0 0.0
        %1424 = vmatprep.subr.mxu0 0.0
        %1425 = vmatpush1.msra.mxu0 0.0
        %1426 = vmatprep.subr.mxu0 0.0
        %1427 = vmatpush1.msra.mxu0 0.0
        %1428 = vmatprep.subr.mxu0 0.0
        %1429 = vmatpush1.msra.mxu0 0.0
        %1430 = vmatprep.subr.mxu0 0.0
        %1431 = vmatpush1.msra.mxu0 0.0
        %1432 = vmatprep.subr.mxu0 0.0
        %1433 = vmatpush1.msra.mxu0 0.0
        %1434 = vmatprep.subr.mxu0 0.0
        %1435 = vmatpush1.msra.mxu0 0.0
        %1436 = vmatprep.subr.mxu0 0.0
        %1437 = vmatpush1.msra.mxu0 0.0
        %1438 = vmatprep.subr.mxu0 0.0
        %1439 = vmatpush1.msra.mxu0 0.0
        %1440 = vmatprep.subr.mxu0 0.0
        %1441 = vmatpush1.msra.mxu0 0.0
        %1442 = vmatprep.subr.mxu0 0.0
        %1443 = vmatpush1.msra.mxu0 0.0
        %1444 = vmatprep.subr.mxu0 0.0
        %1445 = vmatpush1.msra.mxu0 0.0
        %1446 = vmatprep.subr.mxu0 0.0
        %1447 = vmatpush1.msra.mxu0 0.0
        %1448 = vmatprep.subr.mxu0 0.0
        %1449 = vmatpush1.msra.mxu0 0.0
        %1450 = vmatprep.subr.mxu0 0.0
        %1451 = vmatpush1.msra.mxu0 0.0
        %1452 = vmatprep.mubr.f32.mxu0 0.0
        %1453 = vmatmul.mubr.f32.gmra.mrb[0].mxu0 %v1383
        %v1454 = vpop.f32.mrb[0].mxu0
        %v1455 = vadd.f32 0.0, %v1454
        %v1456 = vpop.f32.mrb[0].mxu0
        %1457 = vdwg.mxu0
        %v1458 = vadd.f32 %v1371, %v1455
        %s1459 = scalar_lea.vmem %s13, 4
        %v1460 = vld [vmem:[%s1459] sm:$0xf]
        %v1462 = vsel %vm968, %v1460, 0
        %v1465 = vsel %vm972, %v958, 0
        %1467 = vmatprep.subr.mxu0 0.0
        %1468 = vmatpush1.msra.mxu0 %v1465
        %1469 = vmatprep.subr.mxu0 0.0
        %1470 = vmatpush1.msra.mxu0 0.0
        %1471 = vmatprep.subr.mxu0 0.0
        %1472 = vmatpush1.msra.mxu0 0.0
        %1473 = vmatprep.subr.mxu0 0.0
        %1474 = vmatpush1.msra.mxu0 0.0
        %1475 = vmatprep.subr.mxu0 0.0
        %1476 = vmatpush1.msra.mxu0 0.0
        %1477 = vmatprep.subr.mxu0 0.0
        %1478 = vmatpush1.msra.mxu0 0.0
        %1479 = vmatprep.subr.mxu0 0.0
        %1480 = vmatpush1.msra.mxu0 0.0
        %1481 = vmatprep.subr.mxu0 0.0
        %1482 = vmatpush1.msra.mxu0 0.0
        %1483 = vmatprep.subr.mxu0 0.0
        %1484 = vmatpush1.msra.mxu0 0.0
        %1485 = vmatprep.subr.mxu0 0.0
        %1486 = vmatpush1.msra.mxu0 0.0
        %1487 = vmatprep.subr.mxu0 0.0
        %1488 = vmatpush1.msra.mxu0 0.0
        %1489 = vmatprep.subr.mxu0 0.0
        %1490 = vmatpush1.msra.mxu0 0.0
        %1491 = vmatprep.subr.mxu0 0.0
        %1492 = vmatpush1.msra.mxu0 0.0
        %1493 = vmatprep.subr.mxu0 0.0
        %1494 = vmatpush1.msra.mxu0 0.0
        %1495 = vmatprep.subr.mxu0 0.0
        %1496 = vmatpush1.msra.mxu0 0.0
        %1497 = vmatprep.subr.mxu0 0.0
        %1498 = vmatpush1.msra.mxu0 0.0
        %1499 = vmatprep.subr.mxu0 0.0
        %1500 = vmatpush1.msra.mxu0 0.0
        %1501 = vmatprep.subr.mxu0 0.0
        %1502 = vmatpush1.msra.mxu0 0.0
        %1503 = vmatprep.subr.mxu0 0.0
        %1504 = vmatpush1.msra.mxu0 0.0
        %1505 = vmatprep.subr.mxu0 0.0
        %1506 = vmatpush1.msra.mxu0 0.0
        %1507 = vmatprep.subr.mxu0 0.0
        %1508 = vmatpush1.msra.mxu0 0.0
        %1509 = vmatprep.subr.mxu0 0.0
        %1510 = vmatpush1.msra.mxu0 0.0
        %1511 = vmatprep.subr.mxu0 0.0
        %1512 = vmatpush1.msra.mxu0 0.0
        %1513 = vmatprep.subr.mxu0 0.0
        %1514 = vmatpush1.msra.mxu0 0.0
        %1515 = vmatprep.subr.mxu0 0.0
        %1516 = vmatpush1.msra.mxu0 0.0
        %1517 = vmatprep.subr.mxu0 0.0
        %1518 = vmatpush1.msra.mxu0 0.0
        %1519 = vmatprep.subr.mxu0 0.0
        %1520 = vmatpush1.msra.mxu0 0.0
        %1521 = vmatprep.subr.mxu0 0.0
        %1522 = vmatpush1.msra.mxu0 0.0
        %1523 = vmatprep.subr.mxu0 0.0
        %1524 = vmatpush1.msra.mxu0 0.0
        %1525 = vmatprep.subr.mxu0 0.0
        %1526 = vmatpush1.msra.mxu0 0.0
        %1527 = vmatprep.subr.mxu0 0.0
        %1528 = vmatpush1.msra.mxu0 0.0
        %1529 = vmatprep.subr.mxu0 0.0
        %1530 = vmatpush1.msra.mxu0 0.0
        %1531 = vmatprep.mubr.f32.mxu0 0.0
        %1532 = vmatmul.mubr.f32.gmra.mrb[0].mxu0 %v1462
        %v1533 = vpop.f32.mrb[0].mxu0
        %v1534 = vadd.f32 0.0, %v1533
        %v1535 = vpop.f32.mrb[0].mxu0
        %1536 = vdwg.mxu0
        %v1537 = vadd.f32 %v1458, %v1534
        %s1538 = scalar_lea.vmem %s13, 8
        %v1539 = vld [vmem:[%s1538] sm:$0xf]
        %v1541 = vsel %vm968, %v1539, 0
        %v1544 = vsel %vm972, %v963, 0
        %1546 = vmatprep.subr.mxu0 0.0
        %1547 = vmatpush1.msra.mxu0 %v1544
        %1548 = vmatprep.subr.mxu0 0.0
        %1549 = vmatpush1.msra.mxu0 0.0
        %1550 = vmatprep.subr.mxu0 0.0
        %1551 = vmatpush1.msra.mxu0 0.0
        %1552 = vmatprep.subr.mxu0 0.0
        %1553 = vmatpush1.msra.mxu0 0.0
        %1554 = vmatprep.subr.mxu0 0.0
        %1555 = vmatpush1.msra.mxu0 0.0
        %1556 = vmatprep.subr.mxu0 0.0
        %1557 = vmatpush1.msra.mxu0 0.0
        %1558 = vmatprep.subr.mxu0 0.0
        %1559 = vmatpush1.msra.mxu0 0.0
        %1560 = vmatprep.subr.mxu0 0.0
        %1561 = vmatpush1.msra.mxu0 0.0
        %1562 = vmatprep.subr.mxu0 0.0
        %1563 = vmatpush1.msra.mxu0 0.0
        %1564 = vmatprep.subr.mxu0 0.0
        %1565 = vmatpush1.msra.mxu0 0.0
        %1566 = vmatprep.subr.mxu0 0.0
        %1567 = vmatpush1.msra.mxu0 0.0
        %1568 = vmatprep.subr.mxu0 0.0
        %1569 = vmatpush1.msra.mxu0 0.0
        %1570 = vmatprep.subr.mxu0 0.0
        %1571 = vmatpush1.msra.mxu0 0.0
        %1572 = vmatprep.subr.mxu0 0.0
        %1573 = vmatpush1.msra.mxu0 0.0
        %1574 = vmatprep.subr.mxu0 0.0
        %1575 = vmatpush1.msra.mxu0 0.0
        %1576 = vmatprep.subr.mxu0 0.0
        %1577 = vmatpush1.msra.mxu0 0.0
        %1578 = vmatprep.subr.mxu0 0.0
        %1579 = vmatpush1.msra.mxu0 0.0
        %1580 = vmatprep.subr.mxu0 0.0
        %1581 = vmatpush1.msra.mxu0 0.0
        %1582 = vmatprep.subr.mxu0 0.0
        %1583 = vmatpush1.msra.mxu0 0.0
        %1584 = vmatprep.subr.mxu0 0.0
        %1585 = vmatpush1.msra.mxu0 0.0
        %1586 = vmatprep.subr.mxu0 0.0
        %1587 = vmatpush1.msra.mxu0 0.0
        %1588 = vmatprep.subr.mxu0 0.0
        %1589 = vmatpush1.msra.mxu0 0.0
        %1590 = vmatprep.subr.mxu0 0.0
        %1591 = vmatpush1.msra.mxu0 0.0
        %1592 = vmatprep.subr.mxu0 0.0
        %1593 = vmatpush1.msra.mxu0 0.0
        %1594 = vmatprep.subr.mxu0 0.0
        %1595 = vmatpush1.msra.mxu0 0.0
        %1596 = vmatprep.subr.mxu0 0.0
        %1597 = vmatpush1.msra.mxu0 0.0
        %1598 = vmatprep.subr.mxu0 0.0
        %1599 = vmatpush1.msra.mxu0 0.0
        %1600 = vmatprep.subr.mxu0 0.0
        %1601 = vmatpush1.msra.mxu0 0.0
        %1602 = vmatprep.subr.mxu0 0.0
        %1603 = vmatpush1.msra.mxu0 0.0
        %1604 = vmatprep.subr.mxu0 0.0
        %1605 = vmatpush1.msra.mxu0 0.0
        %1606 = vmatprep.subr.mxu0 0.0
        %1607 = vmatpush1.msra.mxu0 0.0
        %1608 = vmatprep.subr.mxu0 0.0
        %1609 = vmatpush1.msra.mxu0 0.0
        %1610 = vmatprep.mubr.f32.mxu0 0.0
        %1611 = vmatmul.mubr.f32.gmra.mrb[0].mxu0 %v1541
        %v1612 = vpop.f32.mrb[0].mxu0
        %v1613 = vadd.f32 0.0, %v1612
        %v1614 = vpop.f32.mrb[0].mxu0
        %1615 = vdwg.mxu0
        %v1616 = vadd.f32 %v1537, %v1613
        %1617 = vrot.lane.b32.xlu0 %v963, 65
        %v1618 = vpop.permute.xlu0 %1617
        %1620 = vrot.lane.b32.xlu0 %v963, 1
        %v1621 = vpop.permute.xlu0 %1620
        %v1623 = vsel %vm1128, %v1618, %v1621
        %v1624 = vmul.f32 %v1623, %v1134
        %v1625 = vld [vmem:[%s13] sm:$0xf]
        %v1627 = vsel %vm968, %v1625, 0
        %v1630 = vsel %vm972, %v1624, 0
        %1632 = vmatprep.subr.mxu0 0.0
        %1633 = vmatpush1.msra.mxu0 %v1630
        %1634 = vmatprep.subr.mxu0 0.0
        %1635 = vmatpush1.msra.mxu0 0.0
        %1636 = vmatprep.subr.mxu0 0.0
        %1637 = vmatpush1.msra.mxu0 0.0
        %1638 = vmatprep.subr.mxu0 0.0
        %1639 = vmatpush1.msra.mxu0 0.0
        %1640 = vmatprep.subr.mxu0 0.0
        %1641 = vmatpush1.msra.mxu0 0.0
        %1642 = vmatprep.subr.mxu0 0.0
        %1643 = vmatpush1.msra.mxu0 0.0
        %1644 = vmatprep.subr.mxu0 0.0
        %1645 = vmatpush1.msra.mxu0 0.0
        %1646 = vmatprep.subr.mxu0 0.0
        %1647 = vmatpush1.msra.mxu0 0.0
        %1648 = vmatprep.subr.mxu0 0.0
        %1649 = vmatpush1.msra.mxu0 0.0
        %1650 = vmatprep.subr.mxu0 0.0
        %1651 = vmatpush1.msra.mxu0 0.0
        %1652 = vmatprep.subr.mxu0 0.0
        %1653 = vmatpush1.msra.mxu0 0.0
        %1654 = vmatprep.subr.mxu0 0.0
        %1655 = vmatpush1.msra.mxu0 0.0
        %1656 = vmatprep.subr.mxu0 0.0
        %1657 = vmatpush1.msra.mxu0 0.0
        %1658 = vmatprep.subr.mxu0 0.0
        %1659 = vmatpush1.msra.mxu0 0.0
        %1660 = vmatprep.subr.mxu0 0.0
        %1661 = vmatpush1.msra.mxu0 0.0
        %1662 = vmatprep.subr.mxu0 0.0
        %1663 = vmatpush1.msra.mxu0 0.0
        %1664 = vmatprep.subr.mxu0 0.0
        %1665 = vmatpush1.msra.mxu0 0.0
        %1666 = vmatprep.subr.mxu0 0.0
        %1667 = vmatpush1.msra.mxu0 0.0
        %1668 = vmatprep.subr.mxu0 0.0
        %1669 = vmatpush1.msra.mxu0 0.0
        %1670 = vmatprep.subr.mxu0 0.0
        %1671 = vmatpush1.msra.mxu0 0.0
        %1672 = vmatprep.subr.mxu0 0.0
        %1673 = vmatpush1.msra.mxu0 0.0
        %1674 = vmatprep.subr.mxu0 0.0
        %1675 = vmatpush1.msra.mxu0 0.0
        %1676 = vmatprep.subr.mxu0 0.0
        %1677 = vmatpush1.msra.mxu0 0.0
        %1678 = vmatprep.subr.mxu0 0.0
        %1679 = vmatpush1.msra.mxu0 0.0
        %1680 = vmatprep.subr.mxu0 0.0
        %1681 = vmatpush1.msra.mxu0 0.0
        %1682 = vmatprep.subr.mxu0 0.0
        %1683 = vmatpush1.msra.mxu0 0.0
        %1684 = vmatprep.subr.mxu0 0.0
        %1685 = vmatpush1.msra.mxu0 0.0
        %1686 = vmatprep.subr.mxu0 0.0
        %1687 = vmatpush1.msra.mxu0 0.0
        %1688 = vmatprep.subr.mxu0 0.0
        %1689 = vmatpush1.msra.mxu0 0.0
        %1690 = vmatprep.subr.mxu0 0.0
        %1691 = vmatpush1.msra.mxu0 0.0
        %1692 = vmatprep.subr.mxu0 0.0
        %1693 = vmatpush1.msra.mxu0 0.0
        %1694 = vmatprep.subr.mxu0 0.0
        %1695 = vmatpush1.msra.mxu0 0.0
        %1696 = vmatprep.mubr.f32.mxu0 0.0
        %1697 = vmatmul.mubr.f32.gmra.mrb[0].mxu0 %v1627
        %v1698 = vpop.f32.mrb[0].mxu0
        %v1699 = vadd.f32 0.0, %v1698
        %v1700 = vpop.f32.mrb[0].mxu0
        %1701 = vdwg.mxu0
        %v1702 = vadd.f32 %v1616, %v1699
        %v1703 = vld [vmem:[%s14] sm:$0xf]
        %1705 = vset.pattern.permute.xlu0 0
        %1706 = vperm.xlu0 %1705, %v1703
        %v1707 = vpop.permute.xlu0 %1706
        %v1709 = vadd.f32 %v1702, %v1707
        %v1710 = vmax.f32 %v1709, 0.0
        %vm1711 = vcmask 519168
        %1712 = vst.msk [vmem:[%s813] sm:$0xf] %vm1711, %v1710
        %v1713 = vmax.f32 %v899, %v900
        %v1714 = vmax.f32 %v901, %v902
        %v1715 = vmax.f32 %v1713, %v1714
        %v1716 = vld [vmem:[%s15] sm:$0xf]
        %1718 = vset.pattern.permute.xlu0 0
        %1719 = vperm.xlu0 %1718, %v1716
        %v1720 = vpop.permute.xlu0 %1719
        %v1722 = vmul.f32 %v1715, %v1720
        %v1723 = vld [vmem:[%s16] sm:$0xf]
        %1725 = vset.pattern.permute.xlu0 0
        %1726 = vperm.xlu0 %1725, %v1723
        %v1727 = vpop.permute.xlu0 %1726
        %v1729 = vadd.f32 %v1722, %v1727
        %v1730 = vmax.f32 %v1729, 0.0
        %1731 = vst.msk [vmem:[%s813 + $0x4] sm:$0xf] %vm1711, %v1730
        %v1732 = vld [vmem:[%s891] sm:$0x1]
        %1733 = vrot.lane.b32.xlu0 %v925, 8
        %v1734 = vpop.permute.xlu0 %1733
        %v1736 = vsel %vm957, %v1732, %v1734
        %v1737 = vld [vmem:[%s897] sm:$0x1]
        %1738 = vrot.lane.b32.xlu0 %v932, 8
        %v1739 = vpop.permute.xlu0 %1738
        %v1741 = vsel %vm957, %v1737, %v1739
        %v1742 = vmax.f32 %v903, %v904
        %v1743 = vmax.f32 %v905, %v906
        %v1744 = vmax.f32 %v1742, %v1743
        %v1745 = vmax.f32 %v1736, %v1741
        %v1746 = vmax.f32 %v1744, %v1745
        %1747 = vrot.lane.b32.xlu0 %v918, 65
        %v1748 = vpop.permute.xlu0 %1747
        %1750 = vrot.lane.b32.xlu0 %v918, 1
        %v1751 = vpop.permute.xlu0 %1750
        %v1753 = vsel %vm1128, %v1748, %v1751
        %v1754 = vmul.f32 %v1753, %v898
        %1755 = vrot.lane.b32.xlu0 %v932, 65
        %v1756 = vpop.permute.xlu0 %1755
        %1758 = vrot.lane.b32.xlu0 %v932, 1
        %v1759 = vpop.permute.xlu0 %1758
        %v1761 = vsel %vm1128, %v1756, %v1759
        %v1762 = vmul.f32 %v1761, %v898
        %v1763 = vmax.f32 %v1754, %v1762
        %v1764 = vmax.f32 %v1746, %v1763
        %1766 = vrot.lane.b32.xlu0 %v1741, 65
        %v1767 = vpop.permute.xlu0 %1766
        %1769 = vrot.lane.b32.xlu0 %v1741, 1
        %v1770 = vpop.permute.xlu0 %1769
        %v1772 = vsel %vm1128, %v1767, %v1770
        %v1773 = vmul.f32 %v1772, %v898
        %v1774 = vmax.f32 %v1764, %v1773
        %vm1775 = vcmask 516096
        %1776 = vst.msk [vmem:[%s819] sm:$0x1] %vm1775, %v1774
        %s1777 = sand.u32 %s499, 1
        %s1778 = scalar_lea.sflag [#allocation3], %s1777
        %s1779 = sand.u32 %s499, 1
        %s1780 = smul.addr %s1779, 8
        %s1781 = scalar_lea.vmem [#allocation2], %s1780
        %s1782 = sand.u32 %s527, 1
        %s1783 = scalar_lea.sflag [#allocation5], %s1782
        %s1784 = sand.u32 %s527, 1
        %s1785 = scalar_lea.vmem [#allocation4], %s1784
        // Predicated region
        $region89: #{tpu_custom_call.1} parent=87 // pred_check
          %p1786 = pneg %p509
        $region90: #{tpu_custom_call.1} parent=87 // pred_check_branch
          %1788 = sbr.rel (%p1786) target = $region92
        $region91: #{tpu_custom_call.1} parent=87 // pred_region
          %s1790 = ssub.s32 128, 128
          %1791 = vsyncadd %s1778, %s1790
          %s1792 = sadd.s32 %s41, %s40
          %s1793 = smul.addr %s1792, 128
          %s1794 = scalar_lea.hbm %s17, %s1793
          %s1796 = sshll.u32 %s1781, 4
          %s1797 = int_to_ptr.vmem [resolvable:$true] %s1796
          %1799 = dma.vmem_to_hbm [thread:$0]  %s1797, 128, %s1794, %s1778
        $region92: #{tpu_custom_call.1} parent=87 // pred_fallthru
          _
        // Predicated region
        $region93: #{tpu_custom_call.1} parent=87 // pred_check
          %p1800 = pneg %p537
        $region94: #{tpu_custom_call.1} parent=87 // pred_check_branch
          %1802 = sbr.rel (%p1800) target = $region96
        $region95: #{tpu_custom_call.1} parent=87 // pred_region
          %s1804 = ssub.s32 16, 16
          %1805 = vsyncadd %s1783, %s1804
          %s1806 = sadd.s32 %s41, %s40
          %s1807 = smul.addr %s1806, 16
          %s1808 = scalar_lea.hbm %s18, %s1807
          %s1810 = sshll.u32 %s1785, 4
          %s1811 = int_to_ptr.vmem [resolvable:$true] %s1810
          %1813 = dma.vmem_to_hbm [thread:$0]  %s1811, 16, %s1808, %s1783
        $region96: #{tpu_custom_call.1} parent=87 // pred_fallthru
          _
      $region88: #{tpu_custom_call.1} parent=5 // pred_fallthru
        _
      %p1814 = scmp.le.s32.totalorder 2, %s31
      // Predicated region
      $region97: #{tpu_custom_call.1} parent=5 // pred_check
        %p1815 = pneg %p1814
      $region98: #{tpu_custom_call.1} parent=5 // pred_check_branch
        %1817 = sbr.rel (%p1815) target = $region100
      $region99: #{tpu_custom_call.1} parent=5 // pred_region
        %s1818 = ssub.s32 %s31, 2
        // Predicated region
        $region101: #{tpu_custom_call.1} parent=99 // pred_check
          %p1819 = pneg %p515
        $region102: #{tpu_custom_call.1} parent=99 // pred_check_branch
          %1821 = sbr.rel (%p1819) target = $region104
        $region103: #{tpu_custom_call.1} parent=99 // pred_region
          %s1822 = sand.u32 %s500, 1
          %s1823 = scalar_lea.sflag [#allocation3], %s1822
          %s1824 = sand.u32 %s500, 1
          %s1825 = smul.addr %s1824, 8
          %s1826 = scalar_lea.vmem [#allocation2], %s1825
          %1827 = dma.done %s1823, 128
        $region104: #{tpu_custom_call.1} parent=99 // pred_fallthru
          _
        // Predicated region
        $region105: #{tpu_custom_call.1} parent=99 // pred_check
          %p1828 = pneg %p543
        $region106: #{tpu_custom_call.1} parent=99 // pred_check_branch
          %1830 = sbr.rel (%p1828) target = $region108
        $region107: #{tpu_custom_call.1} parent=99 // pred_region
          %s1831 = sand.u32 %s528, 1
          %s1832 = scalar_lea.sflag [#allocation5], %s1831
          %s1833 = sand.u32 %s528, 1
          %s1834 = scalar_lea.vmem [#allocation4], %s1833
          %1835 = dma.done %s1832, 16
        $region108: #{tpu_custom_call.1} parent=99 // pred_fallthru
          _
      $region100: #{tpu_custom_call.1} parent=5 // pred_fallthru
        _
    $region6: #{tpu_custom_call.1} parent=1 // loop_footer
      %s35 = sadd.s32 1, %s31
    $region7: #{tpu_custom_call.1} parent=1 // loop_footer_branch
      %30 = sbr.rel target = $region3
    $region8: #{tpu_custom_call.1} parent=1 // loop_exit
      _
    %1836 = vsyncpa [#allocation3], 1
    %s1837 = scalar_lea.sflag [#allocation3], 1
    %1838 = vsyncpa %s1837, 1
    %1839 = vsyncpa [#allocation5], 1
    %s1840 = scalar_lea.sflag [#allocation5], 1
    %1841 = vsyncpa %s1840, 1

</llo_original>
